<compile_context>
chip_gen: v7x
topology: tpu7x:2x2x1
jax: 0.10.0
libtpu: 0.0.40
codegen_flags: <defaults>
</compile_context>

<pallas_src>
import functools

import jax
import jax.numpy as jnp
from jax import lax
from jax.experimental import pallas as pl
from jax.experimental.pallas import tpu as pltpu


def _round_up(x, m):
    return -(-x // m) * m


def _conv2d_same_kernel(body_ref, halo_ref, w_ref, b_ref, o_ref, patches_ref, *,
                        K, ka, W, bH, Cin_pad, Cout, split_kh, compute_dtype):
    """One (batch, row-tile) step: im2col into VMEM scratch + MXU contraction."""
    bHW = bH * W

    # Contiguous slab of H-padded rows for this tile:
    #   xr[c, q] == x_hpad[c, tile_row0 + q // W, q % W]
    # TODO(synk): stage body/halo straight into a persistent VMEM scratch (or
    # stitch per-kh) to drop this one extra full-width pass per step.
    xr = jnp.concatenate([body_ref[0], halo_ref[0]], axis=-1)

    col = None
    if K > 1:
        # output-column index of every lane (only used by the border fixups)
        col = lax.broadcasted_iota(jnp.int32, (1, bHW), 1) % W

    kh_per_chunk = 1 if split_kh else K
    num_chunks = K if split_kh else 1
    chunk_cols = kh_per_chunk * K * Cin_pad

    acc = None
    for chunk in range(num_chunks):
        for kh_local in range(kh_per_chunk):
            kh = chunk * kh_per_chunk + kh_local
            # One (possibly unaligned) slab per kh; the K taps of this kh are
            # small lane rotations of it.
            slab = xr[:, kh * W:kh * W + bHW]
            taps = {}
            for kw in range(K):
                s = kw - ka
                taps[s] = slab if s == 0 else pltpu.roll(
                    slab, shift=(-s) % bHW, axis=1)

            def base_tap(s2, taps=taps, slab=slab):
                # (only needed for even K, where the mirror shift may not be a tap)
                if s2 not in taps:
                    taps[s2] = pltpu.roll(slab, shift=(-s2) % bHW, axis=1)
                return taps[s2]

            for kw in range(K):
                s = kw - ka
                t = taps[s]
                # Left border: output col c (< -s) must read reflected col
                # -(c+s), which is exactly what the tap with shift -s-2c reads
                # at the same column -> masked select, no extra window.
                for c in range(max(0, -s)):
                    t = jnp.where(col == c, base_tap(-s - 2 * c), t)
                # Right border: col W-1-i (i < s) must read reflected col
                # 2(W-1)-(c+s) == what the tap with shift 2i-s reads there.
                for i in range(max(0, s)):
                    c = W - 1 - i
                    t = jnp.where(col == c, base_tap(2 * i - s), t)
                r0 = (kh_local * K + kw) * Cin_pad
                patches_ref[r0:r0 + Cin_pad, :] = t.astype(compute_dtype)

        # MXU contraction for this chunk, accumulated in f32.
        w_chunk = w_ref[:, chunk * chunk_cols:(chunk + 1) * chunk_cols]
        d = jnp.dot(w_chunk, patches_ref[...],
                    preferred_element_type=jnp.float32)
        acc = d if acc is None else acc + d

    acc = acc + b_ref[...].astype(jnp.float32)           # (Cout, 1) broadcast
    o_ref[...] = acc[None, :, :].astype(o_ref.dtype)     # lane-dense store


def _vmem_limit_bytes():
    """Per-generation VMEM limit: ~48 MiB on v7x (64 MiB phys), ~96 MiB on
    v5e/v6e (128 MiB phys)."""
    mib = 1024 * 1024
    try:
        phys = int(getattr(pltpu.get_tpu_info(), "vmem_capacity_bytes",
                           128 * mib))
    except Exception:
        phys = 64 * mib          # be conservative if we cannot query
    return (48 * mib) if phys <= 64 * mib else (96 * mib)


def _pick_halo(bHW, halo_need):
    """Smallest lane-aligned block that divides bHW and covers halo_need."""
    for m in range(1, bHW // 128 + 1):
        cand = 128 * m
        if cand >= halo_need and bHW % cand == 0:
            return cand
    return None


def _choose_tiling(N, H, W, K, Cin_pad, Cout, in_bytes, out_bytes, c_bytes,
                   budget, block_h, split_kh):
    """Pick (block_h, halo_flat, split_kh) against the VMEM budget.

    Targets bHW in the 512-2048 lane range (lane-dense output, low per-step
    overhead, small halo re-read) and prefers enough total grid steps for both
    v7x TensorCores; falls back to the per-kh split contraction when the full
    K*K*Cin im2col scratch is what limits the tile.
    """
    halo_need = max((K - 1) * W, 1)
    if block_h is not None:
        bHW = block_h * W
        if H % block_h or bHW % 128 or bHW < halo_need:
            raise ValueError(f"invalid block_h={block_h} for H={H} W={W} K={K}")
        cands = [block_h]
    else:
        cands = [d for d in range(1, H + 1)
                 if H % d == 0 and (d * W) % 128 == 0 and d * W >= halo_need]
    if not cands:
        # TODO(synk): pad W up to a lane-friendly width as a fallback for
        # shapes where no divisor of H gives a 128-aligned row tile.
        raise ValueError(
            f"no lane-aligned row tile for H={H}, W={W} "
            "(need a divisor d of H with d*W % 128 == 0)")

    def vmem_use(bHW, halo_flat, rows_chunk):
        body = 2 * Cin_pad * bHW * in_bytes              # double-buffered input
        halo = 2 * Cin_pad * halo_flat * in_bytes
        outb = 2 * Cout * bHW * out_bytes                # double-buffered output
        wgt = Cout * (K * K * Cin_pad) * c_bytes + Cout * 4   # single-buffered
        patch = rows_chunk * bHW * c_bytes               # im2col scratch
        work = (Cin_pad * (bHW + halo_flat) + K * Cin_pad * bHW) * in_bytes \
            + Cout * bHW * 4                             # xr + live taps + acc
        return body + halo + outb + wgt + patch + work

    feasible = []
    for bH in sorted(cands):
        bHW = bH * W
        halo_flat = _pick_halo(bHW, halo_need)
        if halo_flat is None:
            continue
        split_opts = [split_kh] if split_kh is not None else [False, True]
        for sk in split_opts:
            rows_chunk = (1 if sk else K) * K * Cin_pad
            if vmem_use(bHW, halo_flat, rows_chunk) <= budget:
                feasible.append((bH, halo_flat, sk))
                break

    if not feasible:
        # Last resort: smallest tile + kh-split contraction; rely on the
        # vmem_limit / compiler to cope.
        bH = min(cands)
        halo_flat = _pick_halo(bH * W, halo_need) or bH * W
        feasible = [(bH, halo_flat, True if split_kh is None else split_kh)]

    def steps(c):
        return N * (H // c[0])

    in_range = [c for c in feasible if 512 <= c[0] * W <= 2048]
    if in_range:
        for min_steps in (8, 2, 1):
            pool = [c for c in in_range if steps(c) >= min_steps]
            if pool:
                return max(pool, key=lambda c: c[0])
    small = [c for c in feasible if c[0] * W <= 2048]
    if small:
        return max(small, key=lambda c: c[0])
    return min(feasible, key=lambda c: c[0])


def conv2d_same(x_nchw, weight_oihw, bias, kernel_size, *, block_h=None,
                split_kh=None, compute_dtype=jnp.bfloat16):
    """Equivalent of Conv2dSame.forward (ReflectionPad2d + Conv2d). NCHW in/out.

    compute_dtype is what the MXU sees (im2col patches + weights); accumulation
    is always f32.  bf16 (default) is MXU-native on v5e/v6e/v7x and halves the
    im2col scratch / store traffic; pass jnp.float32 for strict f32 numerics.
    """
    N, Cin, H, W = x_nchw.shape
    Cout = weight_oihw.shape[0]
    K = int(kernel_size)
    ka = K // 2
    kb = ka - 1 if K % 2 == 0 else ka
    assert weight_oihw.shape == (Cout, Cin, K, K)
    assert bias.shape == (Cout,)
    assert W >= K and H > max(ka, 1) - 0 and H > ka, "spatial dims too small"

    # Sublane-pad channels so every im2col tap store is a full aligned block.
    Cin_pad = _round_up(Cin, 8)

    in_bytes = jnp.dtype(x_nchw.dtype).itemsize
    out_bytes = in_bytes
    c_bytes = jnp.dtype(compute_dtype).itemsize

    vmem_limit = _vmem_limit_bytes()
    budget = (vmem_limit * 3) // 5       # headroom for spills / compiler scratch
    bH, halo_flat, use_split = _choose_tiling(
        N, H, W, K, Cin_pad, Cout, in_bytes, out_bytes, c_bytes, budget,
        block_h, split_kh)
    bHW = bH * W
    nH = H // bH
    halo_stride = bHW // halo_flat

    # ---- reflection pad along H + zero-pad channels to Cin_pad + a few zero
    # rows so the trailing halo block of the last tile stays in bounds.
    # W reflection is done inside the kernel (border-column fixups).
    # TODO(synk): fold the H reflection into the kernel too (leading halo block
    # + per-edge row fixups) to drop this extra HBM pass over the input.
    Hp = H + ka + kb
    rows_total = max(Hp, -(-(H * W + halo_flat) // W))
    xp = jnp.pad(x_nchw, ((0, 0), (0, 0), (ka, kb), (0, 0)), mode="reflect")
    xp = jnp.pad(xp, ((0, 0), (0, Cin_pad - Cin), (0, rows_total - Hp), (0, 0)))
    x_flat = xp.reshape(N, Cin_pad, rows_total * W)

    # weight (Cout, Cin, K, K) -> (Cout, K*K*Cin_pad) in (kh, kw, c) order,
    # zero-padded channels, pre-cast to the MXU compute dtype.
    w = jnp.transpose(weight_oihw, (0, 2, 3, 1))
    w = jnp.pad(w, ((0, 0), (0, 0), (0, 0), (0, Cin_pad - Cin)))
    w_flat = w.reshape(Cout, K * K * Cin_pad).astype(compute_dtype)
    b2 = bias.reshape(Cout, 1).astype(jnp.float32)

    rows_chunk = (1 if use_split else K) * K * Cin_pad

    kernel = functools.partial(
        _conv2d_same_kernel, K=K, ka=ka, W=W, bH=bH, Cin_pad=Cin_pad, Cout=Cout,
        split_kh=use_split, compute_dtype=compute_dtype)

    def call(single_buffer_consts):
        const_kw = (dict(pipeline_mode=pl.Buffered(1))
                    if single_buffer_consts else {})
        return pl.pallas_call(
            kernel,
            out_shape=jax.ShapeDtypeStruct((N, Cout, H * W), x_nchw.dtype),
            grid=(N, nH),
            in_specs=[
                # body rows of this tile (lane-dense flat block)
                pl.BlockSpec((1, Cin_pad, bHW), lambda b, t: (b, 0, t)),
                # trailing halo (the next K-1 rows needed by the lower taps)
                pl.BlockSpec((1, Cin_pad, halo_flat),
                             lambda b, t: (b, 0, (t + 1) * halo_stride)),
                # weights / bias: constant index map -> resident in VMEM
                pl.BlockSpec((Cout, K * K * Cin_pad), lambda b, t: (0, 0),
                             **const_kw),
                pl.BlockSpec((Cout, 1), lambda b, t: (0, 0), **const_kw),
            ],
            out_specs=pl.BlockSpec((1, Cout, bHW), lambda b, t: (b, 0, t)),
            scratch_shapes=[pltpu.VMEM((rows_chunk, bHW), compute_dtype)],
            compiler_params=pltpu.CompilerParams(
                dimension_semantics=("parallel", "parallel"),
                vmem_limit_bytes=vmem_limit,
            ),
        )(x_flat, x_flat, w_flat, b2)

    try:
        out_flat = call(True)
    except Exception:
        # pipeline_mode=pl.Buffered(1) unsupported here: fall back to the
        # default double-buffered weight/bias blocks.
        out_flat = call(False)

    # Back to PyTorch's NCHW convention (free reshape).
    return out_flat.reshape(N, Cout, H, W)


if __name__ == "__main__":
    # Deterministic synthetic parameters (Conv2d: weight (Cout, Cin, K, K)).
    N, Cin, H, W = 2, 4, 16, 16
    Cout, K = 8, 3

    key = jax.random.PRNGKey(0)
    kx, kw_key, kb_key = jax.random.split(key, 3)
    x = jax.random.normal(kx, (N, Cin, H, W), dtype=jnp.float32)
    weight = jax.random.normal(kw_key, (Cout, Cin, K, K), dtype=jnp.float32) * 0.1
    bias = jax.random.normal(kb_key, (Cout,), dtype=jnp.float32) * 0.1

    def ref_conv(x, weight, bias, K):
        ka = K // 2
        kb_ = ka - 1 if K % 2 == 0 else ka
        xp = jnp.pad(x, ((0, 0), (0, 0), (ka, kb_), (ka, kb_)), mode="reflect")
        return jax.lax.conv_general_dilated(
            xp, weight, window_strides=(1, 1), padding="VALID",
            dimension_numbers=("NCHW", "OIHW", "NCHW"),
        ) + bias.reshape(1, -1, 1, 1)

    ref = ref_conv(x, weight, bias, K)

    # Exact-path check: f32 MXU path, fused K*K contraction.
    out_f32 = jax.block_until_ready(
        conv2d_same(x, weight, bias, K, compute_dtype=jnp.float32))
    assert out_f32.shape == (N, Cout, H, W), out_f32.shape
    err = float(jnp.max(jnp.abs(out_f32 - ref)))
    assert jnp.allclose(out_f32, ref, atol=1e-4, rtol=1e-4), err

    # f32, per-kh split contraction (the VMEM-constrained v7x path).
    out_split = jax.block_until_ready(
        conv2d_same(x, weight, bias, K, compute_dtype=jnp.float32,
                    split_kh=True))
    err = float(jnp.max(jnp.abs(out_split - ref)))
    assert jnp.allclose(out_split, ref, atol=1e-4, rtol=1e-4), err

    # Default fast path: bf16 patches/weights on the MXU, f32 accumulation.
    out_bf16 = jax.block_until_ready(conv2d_same(x, weight, bias, K))
    err = float(jnp.max(jnp.abs(out_bf16 - ref)))
    assert jnp.allclose(out_bf16, ref, atol=5e-2, rtol=5e-2), err

    # K=5 / Cin=3 / odd Cout exercises ka=2 border fixups + channel padding.
    N2, C2, H2, W2, Co2, K2 = 1, 3, 32, 32, 5, 5
    k1, k2, k3 = jax.random.split(jax.random.PRNGKey(1), 3)
    x2 = jax.random.normal(k1, (N2, C2, H2, W2), dtype=jnp.float32)
    w2 = jax.random.normal(k2, (Co2, C2, K2, K2), dtype=jnp.float32) * 0.1
    b2 = jax.random.normal(k3, (Co2,), dtype=jnp.float32) * 0.1
    ref2 = ref_conv(x2, w2, b2, K2)
    out2 = jax.block_until_ready(
        conv2d_same(x2, w2, b2, K2, compute_dtype=jnp.float32))
    err2 = float(jnp.max(jnp.abs(out2 - ref2)))
    assert jnp.allclose(out2, ref2, atol=5e-4, rtol=5e-4), err2

    print("KERNEL_OK")
</pallas_src>

<mosaic_0001>
module attributes {stable_mosaic.version = 11 : i64} {
  func.func @_conv2d_same_kernel(%arg0: i32, %arg1: i32, %arg2: memref<1x8x256xf32, #tpu.memory_space<vmem>>, %arg3: memref<1x8x128xf32, #tpu.memory_space<vmem>>, %arg4: memref<8x72xf32, #tpu.memory_space<vmem>>, %arg5: memref<8x1xf32, #tpu.memory_space<vmem>>, %arg6: memref<1x8x256xf32, #tpu.memory_space<vmem>>, %arg7: memref<72x256xf32, #tpu.memory_space<vmem>>) attributes {dimension_semantics = [#tpu.dimension_semantics<parallel>, #tpu.dimension_semantics<parallel>], iteration_bounds = array<i64: 2, 1>, scalar_prefetch = 0 : i64, scratch_operands = 1 : i64, tpu.core_type = #tpu.core_type<tc>, window_params = [{transform_indices = @transform_0, window_bounds = array<i64: 1, 8, 256>}, {transform_indices = @transform_1, window_bounds = array<i64: 1, 8, 128>}, {pipeline_mode = #tpu.pipeline_mode<synchronous>, transform_indices = @transform_2, window_bounds = array<i64: 8, 72>}, {pipeline_mode = #tpu.pipeline_mode<synchronous>, transform_indices = @transform_3, window_bounds = array<i64: 8, 1>}, {transform_indices = @transform_4, window_bounds = array<i64: 1, 8, 256>}]} {
    %c0 = arith.constant 0 : index
    %c0_0 = arith.constant 0 : index
    %c0_1 = arith.constant 0 : index
    %0 = vector.load %arg2[%c0, %c0_0, %c0_1] : memref<1x8x256xf32, #tpu.memory_space<vmem>>, vector<1x8x256xf32>
    %1 = vector.shape_cast %0 : vector<1x8x256xf32> to vector<8x256xf32>
    %c0_2 = arith.constant 0 : index
    %c0_3 = arith.constant 0 : index
    %c0_4 = arith.constant 0 : index
    %2 = vector.load %arg3[%c0_2, %c0_3, %c0_4] : memref<1x8x128xf32, #tpu.memory_space<vmem>>, vector<1x8x128xf32>
    %3 = vector.shape_cast %2 : vector<1x8x128xf32> to vector<8x128xf32>
    %4 = tpu.concatenate %1, %3 in 1 : vector<8x256xf32>, vector<8x128xf32> -> vector<8x384xf32>
    %5 = tpu.iota {dimensions = array<i32: 1>} : vector<1x256xi32>
    %c16_i32 = arith.constant 16 : i32
    %c0_i32 = arith.constant 0 : i32
    %6 = arith.cmpi eq, %c16_i32, %c0_i32 : i32
    %c1_i32 = arith.constant 1 : i32
    %7 = arith.select %6, %c1_i32, %c16_i32 : i32
    %8 = vector.broadcast %7 : i32 to vector<1x256xi32>
    %9 = arith.remsi %5, %8 : vector<1x256xi32>
    %c0_i32_5 = arith.constant 0 : i32
    %10 = vector.broadcast %c0_i32_5 : i32 to vector<1x256xi32>
    %11 = arith.cmpi ne, %9, %10 : vector<1x256xi32>
    %c0_i32_6 = arith.constant 0 : i32
    %12 = vector.broadcast %c0_i32_6 : i32 to vector<1x256xi32>
    %13 = arith.cmpi slt, %9, %12 : vector<1x256xi32>
    %c0_i32_7 = arith.constant 0 : i32
    %14 = arith.cmpi slt, %7, %c0_i32_7 : i32
    %15 = vector.broadcast %14 : i1 to vector<1x256xi1>
    %16 = vector.broadcast %15 : vector<1x256xi1> to vector<1x256xi1>
    %17 = arith.xori %13, %16 : vector<1x256xi1>
    %18 = arith.andi %17, %11 : vector<1x256xi1>
    %19 = vector.broadcast %7 : i32 to vector<1x256xi32>
    %20 = arith.addi %9, %19 : vector<1x256xi32>
    %21 = arith.select %18, %20, %9 : vector<1x256xi1>, vector<1x256xi32>
    %22 = vector.extract_strided_slice %4 {offsets = [0, 0], sizes = [8, 256], strides = [1, 1]} : vector<8x384xf32> to vector<8x256xf32>
    %c1_i32_8 = arith.constant 1 : i32
    %23 = tpu.dynamic_rotate %22 by %c1_i32_8 dim 1 : vector<8x256xf32>, i32 -> vector<8x256xf32>
    %c255_i32 = arith.constant 255 : i32
    %24 = tpu.dynamic_rotate %22 by %c255_i32 dim 1 : vector<8x256xf32>, i32 -> vector<8x256xf32>
    %c0_i32_9 = arith.constant 0 : i32
    %25 = vector.broadcast %c0_i32_9 : i32 to vector<1x256xi32>
    %26 = arith.cmpi eq, %21, %25 : vector<1x256xi32>
    %27 = vector.shape_cast %26 : vector<1x256xi1> to vector<1x256xi1>
    %28 = vector.broadcast %27 : vector<1x256xi1> to vector<8x256xi1>
    %29 = arith.select %28, %24, %23 : vector<8x256xi1>, vector<8x256xf32>
    %c0_10 = arith.constant 0 : index
    %c0_11 = arith.constant 0 : index
    %30 = vector.load %arg7[%c0_10, %c0_11] : memref<72x256xf32, #tpu.memory_space<vmem>>, vector<8x256xf32>
    tpu.vector_store %arg7[%c0_10, %c0_11], %29 {strides = array<i32>} : memref<72x256xf32, #tpu.memory_space<vmem>>, vector<8x256xf32>,
    %c8 = arith.constant 8 : index
    %c0_12 = arith.constant 0 : index
    %31 = vector.load %arg7[%c8, %c0_12] : memref<72x256xf32, #tpu.memory_space<vmem>>, vector<8x256xf32>
    tpu.vector_store %arg7[%c8, %c0_12], %22 {strides = array<i32>} : memref<72x256xf32, #tpu.memory_space<vmem>>, vector<8x256xf32>,
    %c15_i32 = arith.constant 15 : i32
    %32 = vector.broadcast %c15_i32 : i32 to vector<1x256xi32>
    %33 = arith.cmpi eq, %21, %32 : vector<1x256xi32>
    %34 = vector.shape_cast %33 : vector<1x256xi1> to vector<1x256xi1>
    %35 = vector.broadcast %34 : vector<1x256xi1> to vector<8x256xi1>
    %36 = arith.select %35, %23, %24 : vector<8x256xi1>, vector<8x256xf32>
    %c16 = arith.constant 16 : index
    %c0_13 = arith.constant 0 : index
    %37 = vector.load %arg7[%c16, %c0_13] : memref<72x256xf32, #tpu.memory_space<vmem>>, vector<8x256xf32>
    tpu.vector_store %arg7[%c16, %c0_13], %36 {strides = array<i32>} : memref<72x256xf32, #tpu.memory_space<vmem>>, vector<8x256xf32>,
    %38 = vector.extract_strided_slice %4 {offsets = [0, 16], sizes = [8, 256], strides = [1, 1]} : vector<8x384xf32> to vector<8x256xf32>
    %c1_i32_14 = arith.constant 1 : i32
    %39 = tpu.dynamic_rotate %38 by %c1_i32_14 dim 1 : vector<8x256xf32>, i32 -> vector<8x256xf32>
    %c255_i32_15 = arith.constant 255 : i32
    %40 = tpu.dynamic_rotate %38 by %c255_i32_15 dim 1 : vector<8x256xf32>, i32 -> vector<8x256xf32>
    %c0_i32_16 = arith.constant 0 : i32
    %41 = vector.broadcast %c0_i32_16 : i32 to vector<1x256xi32>
    %42 = arith.cmpi eq, %21, %41 : vector<1x256xi32>
    %43 = vector.shape_cast %42 : vector<1x256xi1> to vector<1x256xi1>
    %44 = vector.broadcast %43 : vector<1x256xi1> to vector<8x256xi1>
    %45 = arith.select %44, %40, %39 : vector<8x256xi1>, vector<8x256xf32>
    %c24 = arith.constant 24 : index
    %c0_17 = arith.constant 0 : index
    %46 = vector.load %arg7[%c24, %c0_17] : memref<72x256xf32, #tpu.memory_space<vmem>>, vector<8x256xf32>
    tpu.vector_store %arg7[%c24, %c0_17], %45 {strides = array<i32>} : memref<72x256xf32, #tpu.memory_space<vmem>>, vector<8x256xf32>,
    %c32 = arith.constant 32 : index
    %c0_18 = arith.constant 0 : index
    %47 = vector.load %arg7[%c32, %c0_18] : memref<72x256xf32, #tpu.memory_space<vmem>>, vector<8x256xf32>
    tpu.vector_store %arg7[%c32, %c0_18], %38 {strides = array<i32>} : memref<72x256xf32, #tpu.memory_space<vmem>>, vector<8x256xf32>,
    %c15_i32_19 = arith.constant 15 : i32
    %48 = vector.broadcast %c15_i32_19 : i32 to vector<1x256xi32>
    %49 = arith.cmpi eq, %21, %48 : vector<1x256xi32>
    %50 = vector.shape_cast %49 : vector<1x256xi1> to vector<1x256xi1>
    %51 = vector.broadcast %50 : vector<1x256xi1> to vector<8x256xi1>
    %52 = arith.select %51, %39, %40 : vector<8x256xi1>, vector<8x256xf32>
    %c40 = arith.constant 40 : index
    %c0_20 = arith.constant 0 : index
    %53 = vector.load %arg7[%c40, %c0_20] : memref<72x256xf32, #tpu.memory_space<vmem>>, vector<8x256xf32>
    tpu.vector_store %arg7[%c40, %c0_20], %52 {strides = array<i32>} : memref<72x256xf32, #tpu.memory_space<vmem>>, vector<8x256xf32>,
    %54 = vector.extract_strided_slice %4 {offsets = [0, 32], sizes = [8, 256], strides = [1, 1]} : vector<8x384xf32> to vector<8x256xf32>
    %c1_i32_21 = arith.constant 1 : i32
    %55 = tpu.dynamic_rotate %54 by %c1_i32_21 dim 1 : vector<8x256xf32>, i32 -> vector<8x256xf32>
    %c255_i32_22 = arith.constant 255 : i32
    %56 = tpu.dynamic_rotate %54 by %c255_i32_22 dim 1 : vector<8x256xf32>, i32 -> vector<8x256xf32>
    %c0_i32_23 = arith.constant 0 : i32
    %57 = vector.broadcast %c0_i32_23 : i32 to vector<1x256xi32>
    %58 = arith.cmpi eq, %21, %57 : vector<1x256xi32>
    %59 = vector.shape_cast %58 : vector<1x256xi1> to vector<1x256xi1>
    %60 = vector.broadcast %59 : vector<1x256xi1> to vector<8x256xi1>
    %61 = arith.select %60, %56, %55 : vector<8x256xi1>, vector<8x256xf32>
    %c48 = arith.constant 48 : index
    %c0_24 = arith.constant 0 : index
    %62 = vector.load %arg7[%c48, %c0_24] : memref<72x256xf32, #tpu.memory_space<vmem>>, vector<8x256xf32>
    tpu.vector_store %arg7[%c48, %c0_24], %61 {strides = array<i32>} : memref<72x256xf32, #tpu.memory_space<vmem>>, vector<8x256xf32>,
    %c56 = arith.constant 56 : index
    %c0_25 = arith.constant 0 : index
    %63 = vector.load %arg7[%c56, %c0_25] : memref<72x256xf32, #tpu.memory_space<vmem>>, vector<8x256xf32>
    tpu.vector_store %arg7[%c56, %c0_25], %54 {strides = array<i32>} : memref<72x256xf32, #tpu.memory_space<vmem>>, vector<8x256xf32>,
    %c15_i32_26 = arith.constant 15 : i32
    %64 = vector.broadcast %c15_i32_26 : i32 to vector<1x256xi32>
    %65 = arith.cmpi eq, %21, %64 : vector<1x256xi32>
    %66 = vector.shape_cast %65 : vector<1x256xi1> to vector<1x256xi1>
    %67 = vector.broadcast %66 : vector<1x256xi1> to vector<8x256xi1>
    %68 = arith.select %67, %55, %56 : vector<8x256xi1>, vector<8x256xf32>
    %c64 = arith.constant 64 : index
    %c0_27 = arith.constant 0 : index
    %69 = vector.load %arg7[%c64, %c0_27] : memref<72x256xf32, #tpu.memory_space<vmem>>, vector<8x256xf32>
    tpu.vector_store %arg7[%c64, %c0_27], %68 {strides = array<i32>} : memref<72x256xf32, #tpu.memory_space<vmem>>, vector<8x256xf32>,
    %c0_28 = arith.constant 0 : index
    %c0_29 = arith.constant 0 : index
    %70 = vector.load %arg4[%c0_28, %c0_29] : memref<8x72xf32, #tpu.memory_space<vmem>>, vector<8x72xf32>
    %c0_30 = arith.constant 0 : index
    %c0_31 = arith.constant 0 : index
    %71 = vector.load %arg7[%c0_30, %c0_31] : memref<72x256xf32, #tpu.memory_space<vmem>>, vector<72x256xf32>
    %cst = arith.constant dense<0.000000e+00> : vector<8x256xf32>
    %72 = tpu.matmul %70, %71, %cst {dimension_numbers = #tpu.dot_dimension_numbers<[1], [0], [0], [1], [0, 0, 1, 1], [], []>} : vector<8x72xf32>, vector<72x256xf32>, vector<8x256xf32> -> vector<8x256xf32>
    %c0_32 = arith.constant 0 : index
    %c0_33 = arith.constant 0 : index
    %73 = vector.load %arg5[%c0_32, %c0_33] : memref<8x1xf32, #tpu.memory_space<vmem>>, vector<8x1xf32>
    %74 = vector.broadcast %73 : vector<8x1xf32> to vector<8x256xf32>
    %75 = arith.addf %72, %74 : vector<8x256xf32>
    %76 = vector.shape_cast %75 : vector<8x256xf32> to vector<1x8x256xf32>
    %c0_34 = arith.constant 0 : index
    %c0_35 = arith.constant 0 : index
    %c0_36 = arith.constant 0 : index
    %77 = vector.load %arg6[%c0_34, %c0_35, %c0_36] : memref<1x8x256xf32, #tpu.memory_space<vmem>>, vector<1x8x256xf32>
    tpu.vector_store %arg6[%c0_34, %c0_35, %c0_36], %76 {strides = array<i32>} : memref<1x8x256xf32, #tpu.memory_space<vmem>>, vector<1x8x256xf32>,
    return
  }
  func.func @transform_0(%arg0: i32, %arg1: i32) -> (i32, i32, i32) {
    %c0_i32 = arith.constant 0 : i32
    %c0_i32_0 = arith.constant 0 : i32
    return %arg0, %c0_i32, %arg1 : i32, i32, i32
  }
  func.func @transform_1(%arg0: i32, %arg1: i32) -> (i32, i32, i32) {
    %c1_i32 = arith.constant 1 : i32
    %0 = arith.addi %arg1, %c1_i32 : i32
    %c2_i32 = arith.constant 2 : i32
    %1 = arith.muli %0, %c2_i32 : i32
    %c0_i32 = arith.constant 0 : i32
    %c0_i32_0 = arith.constant 0 : i32
    return %arg0, %c0_i32, %1 : i32, i32, i32
  }
  func.func @transform_2(%arg0: i32, %arg1: i32) -> (i32, i32) {
    %c0_i32 = arith.constant 0 : i32
    %c0_i32_0 = arith.constant 0 : i32
    %c0_i32_1 = arith.constant 0 : i32
    return %c0_i32, %c0_i32_0 : i32, i32
  }
  func.func @transform_3(%arg0: i32, %arg1: i32) -> (i32, i32) {
    %c0_i32 = arith.constant 0 : i32
    %c0_i32_0 = arith.constant 0 : i32
    %c0_i32_1 = arith.constant 0 : i32
    return %c0_i32, %c0_i32_0 : i32, i32
  }
  func.func @transform_4(%arg0: i32, %arg1: i32) -> (i32, i32, i32) {
    %c0_i32 = arith.constant 0 : i32
    %c0_i32_0 = arith.constant 0 : i32
    return %arg0, %c0_i32, %arg1 : i32, i32, i32
  }
}

module attributes {stable_mosaic.version = 11 : i64} {
  func.func @_conv2d_same_kernel(%arg0: i32, %arg1: i32, %arg2: memref<1x8x256xf32, #tpu.memory_space<vmem>>, %arg3: memref<1x8x128xf32, #tpu.memory_space<vmem>>, %arg4: memref<8x72xf32, #tpu.memory_space<vmem>>, %arg5: memref<8x1xf32, #tpu.memory_space<vmem>>, %arg6: memref<1x8x256xf32, #tpu.memory_space<vmem>>, %arg7: memref<72x256xf32, #tpu.memory_space<vmem>>) attributes {dimension_semantics = [#tpu.dimension_semantics<parallel>, #tpu.dimension_semantics<parallel>], iteration_bounds = array<i64: 2, 1>, scalar_prefetch = 0 : i64, scratch_operands = 1 : i64, tpu.core_type = #tpu.core_type<tc>, window_params = [{transform_indices = @transform_0, window_bounds = array<i64: 1, 8, 256>}, {transform_indices = @transform_1, window_bounds = array<i64: 1, 8, 128>}, {pipeline_mode = #tpu.pipeline_mode<synchronous>, transform_indices = @transform_2, window_bounds = array<i64: 8, 72>}, {pipeline_mode = #tpu.pipeline_mode<synchronous>, transform_indices = @transform_3, window_bounds = array<i64: 8, 1>}, {transform_indices = @transform_4, window_bounds = array<i64: 1, 8, 256>}]} {
    %c0 = arith.constant 0 : index
    %c0_0 = arith.constant 0 : index
    %c0_1 = arith.constant 0 : index
    %0 = vector.load %arg2[%c0, %c0_0, %c0_1] : memref<1x8x256xf32, #tpu.memory_space<vmem>>, vector<1x8x256xf32>
    %1 = vector.shape_cast %0 : vector<1x8x256xf32> to vector<8x256xf32>
    %c0_2 = arith.constant 0 : index
    %c0_3 = arith.constant 0 : index
    %c0_4 = arith.constant 0 : index
    %2 = vector.load %arg3[%c0_2, %c0_3, %c0_4] : memref<1x8x128xf32, #tpu.memory_space<vmem>>, vector<1x8x128xf32>
    %3 = vector.shape_cast %2 : vector<1x8x128xf32> to vector<8x128xf32>
    %4 = tpu.concatenate %1, %3 in 1 : vector<8x256xf32>, vector<8x128xf32> -> vector<8x384xf32>
    %5 = tpu.iota {dimensions = array<i32: 1>} : vector<1x256xi32>
    %c16_i32 = arith.constant 16 : i32
    %c0_i32 = arith.constant 0 : i32
    %6 = arith.cmpi eq, %c16_i32, %c0_i32 : i32
    %c1_i32 = arith.constant 1 : i32
    %7 = arith.select %6, %c1_i32, %c16_i32 : i32
    %8 = vector.broadcast %7 : i32 to vector<1x256xi32>
    %9 = arith.remsi %5, %8 : vector<1x256xi32>
    %c0_i32_5 = arith.constant 0 : i32
    %10 = vector.broadcast %c0_i32_5 : i32 to vector<1x256xi32>
    %11 = arith.cmpi ne, %9, %10 : vector<1x256xi32>
    %c0_i32_6 = arith.constant 0 : i32
    %12 = vector.broadcast %c0_i32_6 : i32 to vector<1x256xi32>
    %13 = arith.cmpi slt, %9, %12 : vector<1x256xi32>
    %c0_i32_7 = arith.constant 0 : i32
    %14 = arith.cmpi slt, %7, %c0_i32_7 : i32
    %15 = vector.broadcast %14 : i1 to vector<1x256xi1>
    %16 = vector.broadcast %15 : vector<1x256xi1> to vector<1x256xi1>
    %17 = arith.xori %13, %16 : vector<1x256xi1>
    %18 = arith.andi %17, %11 : vector<1x256xi1>
    %19 = vector.broadcast %7 : i32 to vector<1x256xi32>
    %20 = arith.addi %9, %19 : vector<1x256xi32>
    %21 = arith.select %18, %20, %9 : vector<1x256xi1>, vector<1x256xi32>
    %22 = vector.extract_strided_slice %4 {offsets = [0, 0], sizes = [8, 256], strides = [1, 1]} : vector<8x384xf32> to vector<8x256xf32>
    %c1_i32_8 = arith.constant 1 : i32
    %23 = tpu.dynamic_rotate %22 by %c1_i32_8 dim 1 : vector<8x256xf32>, i32 -> vector<8x256xf32>
    %c255_i32 = arith.constant 255 : i32
    %24 = tpu.dynamic_rotate %22 by %c255_i32 dim 1 : vector<8x256xf32>, i32 -> vector<8x256xf32>
    %c0_i32_9 = arith.constant 0 : i32
    %25 = vector.broadcast %c0_i32_9 : i32 to vector<1x256xi32>
    %26 = arith.cmpi eq, %21, %25 : vector<1x256xi32>
    %27 = vector.shape_cast %26 : vector<1x256xi1> to vector<1x256xi1>
    %28 = vector.broadcast %27 : vector<1x256xi1> to vector<8x256xi1>
    %29 = arith.select %28, %24, %23 : vector<8x256xi1>, vector<8x256xf32>
    %c0_10 = arith.constant 0 : index
    %c0_11 = arith.constant 0 : index
    %30 = vector.load %arg7[%c0_10, %c0_11] : memref<72x256xf32, #tpu.memory_space<vmem>>, vector<8x256xf32>
    tpu.vector_store %arg7[%c0_10, %c0_11], %29 {strides = array<i32>} : memref<72x256xf32, #tpu.memory_space<vmem>>, vector<8x256xf32>,
    %c8 = arith.constant 8 : index
    %c0_12 = arith.constant 0 : index
    %31 = vector.load %arg7[%c8, %c0_12] : memref<72x256xf32, #tpu.memory_space<vmem>>, vector<8x256xf32>
    tpu.vector_store %arg7[%c8, %c0_12], %22 {strides = array<i32>} : memref<72x256xf32, #tpu.memory_space<vmem>>, vector<8x256xf32>,
    %c15_i32 = arith.constant 15 : i32
    %32 = vector.broadcast %c15_i32 : i32 to vector<1x256xi32>
    %33 = arith.cmpi eq, %21, %32 : vector<1x256xi32>
    %34 = vector.shape_cast %33 : vector<1x256xi1> to vector<1x256xi1>
    %35 = vector.broadcast %34 : vector<1x256xi1> to vector<8x256xi1>
    %36 = arith.select %35, %23, %24 : vector<8x256xi1>, vector<8x256xf32>
    %c16 = arith.constant 16 : index
    %c0_13 = arith.constant 0 : index
    %37 = vector.load %arg7[%c16, %c0_13] : memref<72x256xf32, #tpu.memory_space<vmem>>, vector<8x256xf32>
    tpu.vector_store %arg7[%c16, %c0_13], %36 {strides = array<i32>} : memref<72x256xf32, #tpu.memory_space<vmem>>, vector<8x256xf32>,
    %38 = vector.extract_strided_slice %4 {offsets = [0, 16], sizes = [8, 256], strides = [1, 1]} : vector<8x384xf32> to vector<8x256xf32>
    %c1_i32_14 = arith.constant 1 : i32
    %39 = tpu.dynamic_rotate %38 by %c1_i32_14 dim 1 : vector<8x256xf32>, i32 -> vector<8x256xf32>
    %c255_i32_15 = arith.constant 255 : i32
    %40 = tpu.dynamic_rotate %38 by %c255_i32_15 dim 1 : vector<8x256xf32>, i32 -> vector<8x256xf32>
    %c0_i32_16 = arith.constant 0 : i32
    %41 = vector.broadcast %c0_i32_16 : i32 to vector<1x256xi32>
    %42 = arith.cmpi eq, %21, %41 : vector<1x256xi32>
    %43 = vector.shape_cast %42 : vector<1x256xi1> to vector<1x256xi1>
    %44 = vector.broadcast %43 : vector<1x256xi1> to vector<8x256xi1>
    %45 = arith.select %44, %40, %39 : vector<8x256xi1>, vector<8x256xf32>
    %c24 = arith.constant 24 : index
    %c0_17 = arith.constant 0 : index
    %46 = vector.load %arg7[%c24, %c0_17] : memref<72x256xf32, #tpu.memory_space<vmem>>, vector<8x256xf32>
    tpu.vector_store %arg7[%c24, %c0_17], %45 {strides = array<i32>} : memref<72x256xf32, #tpu.memory_space<vmem>>, vector<8x256xf32>,
    %c32 = arith.constant 32 : index
    %c0_18 = arith.constant 0 : index
    %47 = vector.load %arg7[%c32, %c0_18] : memref<72x256xf32, #tpu.memory_space<vmem>>, vector<8x256xf32>
    tpu.vector_store %arg7[%c32, %c0_18], %38 {strides = array<i32>} : memref<72x256xf32, #tpu.memory_space<vmem>>, vector<8x256xf32>,
    %c15_i32_19 = arith.constant 15 : i32
    %48 = vector.broadcast %c15_i32_19 : i32 to vector<1x256xi32>
    %49 = arith.cmpi eq, %21, %48 : vector<1x256xi32>
    %50 = vector.shape_cast %49 : vector<1x256xi1> to vector<1x256xi1>
    %51 = vector.broadcast %50 : vector<1x256xi1> to vector<8x256xi1>
    %52 = arith.select %51, %39, %40 : vector<8x256xi1>, vector<8x256xf32>
    %c40 = arith.constant 40 : index
    %c0_20 = arith.constant 0 : index
    %53 = vector.load %arg7[%c40, %c0_20] : memref<72x256xf32, #tpu.memory_space<vmem>>, vector<8x256xf32>
    tpu.vector_store %arg7[%c40, %c0_20], %52 {strides = array<i32>} : memref<72x256xf32, #tpu.memory_space<vmem>>, vector<8x256xf32>,
    %54 = vector.extract_strided_slice %4 {offsets = [0, 32], sizes = [8, 256], strides = [1, 1]} : vector<8x384xf32> to vector<8x256xf32>
    %c1_i32_21 = arith.constant 1 : i32
    %55 = tpu.dynamic_rotate %54 by %c1_i32_21 dim 1 : vector<8x256xf32>, i32 -> vector<8x256xf32>
    %c255_i32_22 = arith.constant 255 : i32
    %56 = tpu.dynamic_rotate %54 by %c255_i32_22 dim 1 : vector<8x256xf32>, i32 -> vector<8x256xf32>
    %c0_i32_23 = arith.constant 0 : i32
    %57 = vector.broadcast %c0_i32_23 : i32 to vector<1x256xi32>
    %58 = arith.cmpi eq, %21, %57 : vector<1x256xi32>
    %59 = vector.shape_cast %58 : vector<1x256xi1> to vector<1x256xi1>
    %60 = vector.broadcast %59 : vector<1x256xi1> to vector<8x256xi1>
    %61 = arith.select %60, %56, %55 : vector<8x256xi1>, vector<8x256xf32>
    %c48 = arith.constant 48 : index
    %c0_24 = arith.constant 0 : index
    %62 = vector.load %arg7[%c48, %c0_24] : memref<72x256xf32, #tpu.memory_space<vmem>>, vector<8x256xf32>
    tpu.vector_store %arg7[%c48, %c0_24], %61 {strides = array<i32>} : memref<72x256xf32, #tpu.memory_space<vmem>>, vector<8x256xf32>,
    %c56 = arith.constant 56 : index
    %c0_25 = arith.constant 0 : index
    %63 = vector.load %arg7[%c56, %c0_25] : memref<72x256xf32, #tpu.memory_space<vmem>>, vector<8x256xf32>
    tpu.vector_store %arg7[%c56, %c0_25], %54 {strides = array<i32>} : memref<72x256xf32, #tpu.memory_space<vmem>>, vector<8x256xf32>,
    %c15_i32_26 = arith.constant 15 : i32
    %64 = vector.broadcast %c15_i32_26 : i32 to vector<1x256xi32>
    %65 = arith.cmpi eq, %21, %64 : vector<1x256xi32>
    %66 = vector.shape_cast %65 : vector<1x256xi1> to vector<1x256xi1>
    %67 = vector.broadcast %66 : vector<1x256xi1> to vector<8x256xi1>
    %68 = arith.select %67, %55, %56 : vector<8x256xi1>, vector<8x256xf32>
    %c64 = arith.constant 64 : index
    %c0_27 = arith.constant 0 : index
    %69 = vector.load %arg7[%c64, %c0_27] : memref<72x256xf32, #tpu.memory_space<vmem>>, vector<8x256xf32>
    tpu.vector_store %arg7[%c64, %c0_27], %68 {strides = array<i32>} : memref<72x256xf32, #tpu.memory_space<vmem>>, vector<8x256xf32>,
    %c0_28 = arith.constant 0 : index
    %c0_29 = arith.constant 0 : index
    %70 = vector.load %arg4[%c0_28, %c0_29] : memref<8x72xf32, #tpu.memory_space<vmem>>, vector<8x72xf32>
    %c0_30 = arith.constant 0 : index
    %c0_31 = arith.constant 0 : index
    %71 = vector.load %arg7[%c0_30, %c0_31] : memref<72x256xf32, #tpu.memory_space<vmem>>, vector<72x256xf32>
    %cst = arith.constant dense<0.000000e+00> : vector<8x256xf32>
    %72 = tpu.matmul %70, %71, %cst {dimension_numbers = #tpu.dot_dimension_numbers<[1], [0], [0], [1], [0, 0, 1, 1], [], []>} : vector<8x72xf32>, vector<72x256xf32>, vector<8x256xf32> -> vector<8x256xf32>
    %c0_32 = arith.constant 0 : index
    %c0_33 = arith.constant 0 : index
    %73 = vector.load %arg5[%c0_32, %c0_33] : memref<8x1xf32, #tpu.memory_space<vmem>>, vector<8x1xf32>
    %74 = vector.broadcast %73 : vector<8x1xf32> to vector<8x256xf32>
    %75 = arith.addf %72, %74 : vector<8x256xf32>
    %76 = vector.shape_cast %75 : vector<8x256xf32> to vector<1x8x256xf32>
    %c0_34 = arith.constant 0 : index
    %c0_35 = arith.constant 0 : index
    %c0_36 = arith.constant 0 : index
    %77 = vector.load %arg6[%c0_34, %c0_35, %c0_36] : memref<1x8x256xf32, #tpu.memory_space<vmem>>, vector<1x8x256xf32>
    tpu.vector_store %arg6[%c0_34, %c0_35, %c0_36], %76 {strides = array<i32>} : memref<1x8x256xf32, #tpu.memory_space<vmem>>, vector<1x8x256xf32>,
    return
  }
  func.func @transform_0(%arg0: i32, %arg1: i32) -> (i32, i32, i32) {
    %c0_i32 = arith.constant 0 : i32
    %c0_i32_0 = arith.constant 0 : i32
    return %arg0, %c0_i32, %arg1 : i32, i32, i32
  }
  func.func @transform_1(%arg0: i32, %arg1: i32) -> (i32, i32, i32) {
    %c1_i32 = arith.constant 1 : i32
    %0 = arith.addi %arg1, %c1_i32 : i32
    %c2_i32 = arith.constant 2 : i32
    %1 = arith.muli %0, %c2_i32 : i32
    %c0_i32 = arith.constant 0 : i32
    %c0_i32_0 = arith.constant 0 : i32
    return %arg0, %c0_i32, %1 : i32, i32, i32
  }
  func.func @transform_2(%arg0: i32, %arg1: i32) -> (i32, i32) {
    %c0_i32 = arith.constant 0 : i32
    %c0_i32_0 = arith.constant 0 : i32
    %c0_i32_1 = arith.constant 0 : i32
    return %c0_i32, %c0_i32_0 : i32, i32
  }
  func.func @transform_3(%arg0: i32, %arg1: i32) -> (i32, i32) {
    %c0_i32 = arith.constant 0 : i32
    %c0_i32_0 = arith.constant 0 : i32
    %c0_i32_1 = arith.constant 0 : i32
    return %c0_i32, %c0_i32_0 : i32, i32
  }
  func.func @transform_4(%arg0: i32, %arg1: i32) -> (i32, i32, i32) {
    %c0_i32 = arith.constant 0 : i32
    %c0_i32_0 = arith.constant 0 : i32
    return %arg0, %c0_i32, %arg1 : i32, i32, i32
  }
}

</mosaic_0001>

<llo_original>
// kernel: tpu_custom_call.1
$region0: #{tpu_custom_call.1}
  #allocation0 [shape = 'u32[]', space=smem, size = 0x4, offset = 0x4, fixed_abs, tag = 'smem constant byte address 0x4 - core index']
  #allocation1 [shape = 'u32[144,128]{1,0:T(1,128)}', space=vmem, size = 0x12000, scoped, tag = 'internal scratch']
  #allocation2 [shape = 'f32[72,256]{1,0:T(8,128)}', space=vmem, size = 0x12000, scoped, tag = 'scratch operand']
  %s0 = inlined_call_operand.hbm [shape: f32[2,8,384], index: 0, kind: input, shape index: {}]
  %s1 = inlined_call_operand.hbm [shape: f32[2,8,384], index: 1, kind: input, shape index: {}]
  %s2 = inlined_call_operand.vmem [shape: f32[8,72], index: 2, kind: input, shape index: {}]
  %s3 = inlined_call_operand.vmem [shape: f32[8,1], index: 3, kind: input, shape index: {}]
  %s4 = inlined_call_operand.hbm [shape: f32[2,8,256], index: 4, kind: output, shape index: {}]
  %s5 = sld [smem:[#allocation0]]
  $region57: #{tpu_custom_call.1} parent=0
    _
  %s7 = ssub.s32 1, %s5
  %s8 = scalar_select 0, %s7, %s5
  $region1: #{tpu_custom_call.1} parent=0
    #allocation3 [shape = 'u8[16384]{0}', space=vmem, size = 0x4000, scoped, tag = 'input window, operand 0']
    #allocation4 [shape = 's32[2]{0}', space=sflag, size = 0x8, scoped, tag = 'scoped memory for tpu_custom_call.1']
    #allocation5 [shape = 's32[2]{0}', space=sflag, size = 0x8, scoped, tag = 'scoped memory for tpu_custom_call.1']
    #allocation6 [shape = 'u8[8192]{0}', space=vmem, size = 0x2000, scoped, tag = 'input window, operand 1']
    #allocation7 [shape = 's32[2]{0}', space=sflag, size = 0x8, scoped, tag = 'scoped memory for tpu_custom_call.1']
    #allocation8 [shape = 'u8[16384]{0}', space=vmem, size = 0x4000, scoped, tag = 'output window, operand 0']
    %9 = vsyncpa [#allocation4], 0
    %s10 = scalar_lea.sflag [#allocation4], 1
    %11 = vsyncpa %s10, 0
    %12 = vsyncpa [#allocation7], 0
    %s13 = scalar_lea.sflag [#allocation7], 1
    %14 = vsyncpa %s13, 0
    %15 = vsyncpa [#allocation5], 0
    %s16 = scalar_lea.sflag [#allocation5], 1
    %17 = vsyncpa %s16, 0
    loop: start=0, step=1, limit=4
    $region2: #{tpu_custom_call.1} parent=1 // loop_pre_header
      _
    $region3: #{tpu_custom_call.1} parent=1 // loop_header
      %s19 = sphi 0, %s23
      %p20 = scmp.ge.s32.totalorder %s19, 4
      %s26 = sphi 0, %s38
      %s27 = sphi 0, %s34
      %s28 = sphi 0, %s26
      %s29 = sphi 0, %s27
      %s30 = sphi 0, %s28
      %s31 = sphi 0, %s29
      %s43 = sphi 0, %s45
      %s46 = sphi 0, %s43
      %s47 = sphi 0, %s46
      %s63 = sphi 0, %s47
      %s75 = sphi 0, %s77
      %s78 = sphi 0, %s75
      %s79 = sphi 0, %s78
      %s95 = sphi 0, %s79
      %s99 = sphi 0, %s99
      %s101 = sphi 0, %s99
      %s102 = sphi 0, %s101
      %s116 = sphi 0, %s102
      %s120 = sphi 0, %s120
      %s122 = sphi 0, %s120
      %s123 = sphi 0, %s122
      %s137 = sphi 0, %s123
      %s145 = sphi 0, %s147
      %s148 = sphi 0, %s145
      %s149 = sphi 0, %s148
      %s165 = sphi 0, %s149
    $region4: #{tpu_custom_call.1} parent=1 // loop_header_branch
      %22 = sbr.rel (%p20) target = $region8
    $region5: #{tpu_custom_call.1} parent=1 // loop_body
      %s24 = ssub.s32 %s19, 1
      %s25 = ssub.s32 %s19, 2
      %s32 = sadd.s32 1, %s27
      %p33 = scmp.ge.s32.totalorder %s32, 1
      %s34 = scalar_select %p33, 0, %s32
      %s35 = sadd.s32 1, %s26
      %s36 = scalar_select %p33, %s35, %s26
      %p37 = scmp.ge.s32.totalorder %s36, 2
      %s38 = scalar_select %p37, 0, %s36
      %s39 = ssub.s32 %s26, %s38
      %s40 = ssub.s32 %s27, %s34
      %s41 = sor.u32 %s39, %s40
      %p42 = scmp.eq.s32.totalorder %s41, 0
      %s44 = sadd.s32 %s43, 1
      %s45 = scalar_select %p42, %s43, %s44
      %p48 = pneg %p42
      %p49 = scmp.eq.s32.totalorder %s19, 1
      %p50 = por %p48, %p49
      %p51 = scmp.ne.s32.totalorder %s43, %s46
      %p52 = scmp.eq.s32.totalorder %s19, 0
      %p53 = por %p51, %p52
      %p54 = scmp.ne.s32.totalorder %s43, %s46
      %p55 = scmp.eq.s32.totalorder %s24, 1
      %p56 = por %p54, %p55
      %p57 = scmp.ne.s32.totalorder %s46, %s47
      %p58 = scmp.eq.s32.totalorder %s24, 0
      %p59 = por %p57, %p58
      %p60 = scmp.ne.s32.totalorder %s46, %s47
      %p61 = scmp.eq.s32.totalorder %s25, 1
      %p62 = por %p60, %p61
      %p64 = scmp.ne.s32.totalorder %s47, %s63
      %p65 = scmp.eq.s32.totalorder %s25, 0
      %p66 = por %p64, %p65
      %s67 = sadd.s32 %s27, 1
      %s68 = smul.u32 %s67, 2
      %s69 = sadd.s32 %s34, 1
      %s70 = smul.u32 %s69, 2
      %s71 = ssub.s32 %s26, %s38
      %s72 = ssub.s32 %s68, %s70
      %s73 = sor.u32 %s71, %s72
      %p74 = scmp.eq.s32.totalorder %s73, 0
      %s76 = sadd.s32 %s75, 1
      %s77 = scalar_select %p74, %s75, %s76
      %p80 = pneg %p74
      %p81 = scmp.eq.s32.totalorder %s19, 1
      %p82 = por %p80, %p81
      %p83 = scmp.ne.s32.totalorder %s75, %s78
      %p84 = scmp.eq.s32.totalorder %s19, 0
      %p85 = por %p83, %p84
      %p86 = scmp.ne.s32.totalorder %s75, %s78
      %p87 = scmp.eq.s32.totalorder %s24, 1
      %p88 = por %p86, %p87
      %p89 = scmp.ne.s32.totalorder %s78, %s79
      %p90 = scmp.eq.s32.totalorder %s24, 0
      %p91 = por %p89, %p90
      %p92 = scmp.ne.s32.totalorder %s78, %s79
      %p93 = scmp.eq.s32.totalorder %s25, 1
      %p94 = por %p92, %p93
      %p96 = scmp.ne.s32.totalorder %s79, %s95
      %p97 = scmp.eq.s32.totalorder %s25, 0
      %p98 = por %p96, %p97
      %s100 = sadd.s32 %s99, 1
      %p103 = scmp.eq.s32.totalorder %s19, 1
      %p104 = scmp.ne.s32.totalorder %s99, %s101
      %p105 = scmp.eq.s32.totalorder %s19, 0
      %p106 = por %p104, %p105
      %p107 = scmp.ne.s32.totalorder %s99, %s101
      %p108 = scmp.eq.s32.totalorder %s24, 1
      %p109 = por %p107, %p108
      %p110 = scmp.ne.s32.totalorder %s101, %s102
      %p111 = scmp.eq.s32.totalorder %s24, 0
      %p112 = por %p110, %p111
      %p113 = scmp.ne.s32.totalorder %s101, %s102
      %p114 = scmp.eq.s32.totalorder %s25, 1
      %p115 = por %p113, %p114
      %p117 = scmp.ne.s32.totalorder %s102, %s116
      %p118 = scmp.eq.s32.totalorder %s25, 0
      %p119 = por %p117, %p118
      %s121 = sadd.s32 %s120, 1
      %p124 = scmp.eq.s32.totalorder %s19, 1
      %p125 = scmp.ne.s32.totalorder %s120, %s122
      %p126 = scmp.eq.s32.totalorder %s19, 0
      %p127 = por %p125, %p126
      %p128 = scmp.ne.s32.totalorder %s120, %s122
      %p129 = scmp.eq.s32.totalorder %s24, 1
      %p130 = por %p128, %p129
      %p131 = scmp.ne.s32.totalorder %s122, %s123
      %p132 = scmp.eq.s32.totalorder %s24, 0
      %p133 = por %p131, %p132
      %p134 = scmp.ne.s32.totalorder %s122, %s123
      %p135 = scmp.eq.s32.totalorder %s25, 1
      %p136 = por %p134, %p135
      %p138 = scmp.ne.s32.totalorder %s123, %s137
      %p139 = scmp.eq.s32.totalorder %s25, 0
      %p140 = por %p138, %p139
      %s141 = ssub.s32 %s26, %s38
      %s142 = ssub.s32 %s27, %s34
      %s143 = sor.u32 %s141, %s142
      %p144 = scmp.eq.s32.totalorder %s143, 0
      %s146 = sadd.s32 %s145, 1
      %s147 = scalar_select %p144, %s145, %s146
      %p150 = pneg %p144
      %p151 = scmp.eq.s32.totalorder %s19, 1
      %p152 = por %p150, %p151
      %p153 = scmp.ne.s32.totalorder %s145, %s148
      %p154 = scmp.eq.s32.totalorder %s19, 0
      %p155 = por %p153, %p154
      %p156 = scmp.ne.s32.totalorder %s145, %s148
      %p157 = scmp.eq.s32.totalorder %s24, 1
      %p158 = por %p156, %p157
      %p159 = scmp.ne.s32.totalorder %s148, %s149
      %p160 = scmp.eq.s32.totalorder %s24, 0
      %p161 = por %p159, %p160
      %p162 = scmp.ne.s32.totalorder %s148, %s149
      %p163 = scmp.eq.s32.totalorder %s25, 1
      %p164 = por %p162, %p163
      %p166 = scmp.ne.s32.totalorder %s149, %s165
      %p167 = scmp.eq.s32.totalorder %s25, 0
      %p168 = por %p166, %p167
      %p169 = scmp.le.s32.totalorder 1, %s19
      %p170 = scmp.lt.s32.totalorder %s19, 3
      %p171 = pnand %p169, %p170
      %p172 = pneg %p171
      // Predicated region
      $region9: #{tpu_custom_call.1} parent=5 // pred_check
        _
      $region10: #{tpu_custom_call.1} parent=5 // pred_check_branch
        %174 = sbr.rel (%p171) target = $region12
      $region11: #{tpu_custom_call.1} parent=5 // pred_region
        %s175 = ssub.s32 %s19, 1
        // Predicated region
        $region13: #{tpu_custom_call.1} parent=11 // pred_check
          %p176 = pneg %p112
        $region14: #{tpu_custom_call.1} parent=11 // pred_check_branch
          %178 = sbr.rel (%p176) target = $region16
        $region15: #{tpu_custom_call.1} parent=11 // pred_region
          _
        $region16: #{tpu_custom_call.1} parent=11 // pred_fallthru
          _
        // Predicated region
        $region17: #{tpu_custom_call.1} parent=11 // pred_check
          %p179 = pneg %p133
        $region18: #{tpu_custom_call.1} parent=11 // pred_check_branch
          %181 = sbr.rel (%p179) target = $region20
        $region19: #{tpu_custom_call.1} parent=11 // pred_region
          _
        $region20: #{tpu_custom_call.1} parent=11 // pred_fallthru
          _
      $region12: #{tpu_custom_call.1} parent=5 // pred_fallthru
        _
      %p182 = scmp.lt.s32.totalorder %s19, 2
      // Predicated region
      $region21: #{tpu_custom_call.1} parent=5 // pred_check
        %p183 = pneg %p182
      $region22: #{tpu_custom_call.1} parent=5 // pred_check_branch
        %185 = sbr.rel (%p183) target = $region24
      $region23: #{tpu_custom_call.1} parent=5 // pred_region
        // Predicated region
        $region25: #{tpu_custom_call.1} parent=23 // pred_check
          %p186 = pneg %p53
        $region26: #{tpu_custom_call.1} parent=23 // pred_check_branch
          %188 = sbr.rel (%p186) target = $region28
        $region27: #{tpu_custom_call.1} parent=23 // pred_region
          %s189 = sand.u32 %s43, 1
          %s190 = scalar_lea.sflag [#allocation4], %s189
          %s191 = sand.u32 %s43, 1
          %s192 = smul.addr %s191, 16
          %s193 = scalar_lea.vmem [#allocation3], %s192
          %s194 = smul.u32 2, %s27
          %s195 = ssub.s32 3, %s194
          %p196 = scmp.lt.s32.totalorder %s195, 2
          %s197 = scalar_select %p196, %s195, 2
          %s198 = smul.u32 128, %s197
          %s200 = ssub.s32 256, %s198
          %201 = vsyncadd %s190, %s200
          %p202 = scmp.ne.s32.totalorder 0, %s198
          %s203 = smul.addr %s26, 3
          %s204 = sadd.s32 %s194, %s203
          %s205 = smul.addr %s204, 128
          %s206 = scalar_lea.hbm %s0, %s205
          %s207 = smul.u32 %s197, 8
          %s208 = sshll.u32 %s207, 4
          %s209 = sshll.u32 %s193, 4
          %s210 = int_to_ptr.vmem [resolvable:$true] %s209
          %212 = dma.hbm_to_vmem [thread:$0]  (%p202), %s206, %s208, %s210, %s190
        $region28: #{tpu_custom_call.1} parent=23 // pred_fallthru
          _
        // Predicated region
        $region29: #{tpu_custom_call.1} parent=23 // pred_check
          %p213 = pneg %p85
        $region30: #{tpu_custom_call.1} parent=23 // pred_check_branch
          %215 = sbr.rel (%p213) target = $region32
        $region31: #{tpu_custom_call.1} parent=23 // pred_region
          %s216 = sand.u32 %s75, 1
          %s217 = scalar_lea.sflag [#allocation7], %s216
          %s218 = sand.u32 %s75, 1
          %s219 = smul.addr %s218, 8
          %s220 = scalar_lea.vmem [#allocation6], %s219
          %s221 = sadd.s32 %s27, 1
          %s222 = smul.u32 %s221, 2
          %s224 = ssub.s32 128, 128
          %225 = vsyncadd %s217, %s224
          %s226 = smul.addr %s26, 3
          %s227 = sadd.s32 %s222, %s226
          %s228 = smul.addr %s227, 128
          %s229 = scalar_lea.hbm %s1, %s228
          %s231 = sshll.u32 %s220, 4
          %s232 = int_to_ptr.vmem [resolvable:$true] %s231
          %234 = dma.hbm_to_vmem [thread:$0]  %s229, 128, %s232, %s217
        $region32: #{tpu_custom_call.1} parent=23 // pred_fallthru
          _
      $region24: #{tpu_custom_call.1} parent=5 // pred_fallthru
        _
      %p235 = scmp.le.s32.totalorder 1, %s19
      %p236 = scmp.lt.s32.totalorder %s19, 3
      %p237 = pnand %p235, %p236
      %p238 = pneg %p237
      // Predicated region
      $region33: #{tpu_custom_call.1} parent=5 // pred_check
        _
      $region34: #{tpu_custom_call.1} parent=5 // pred_check_branch
        %240 = sbr.rel (%p237) target = $region36
      $region35: #{tpu_custom_call.1} parent=5 // pred_region
        %s241 = ssub.s32 %s19, 1
        %s242 = sand.u32 %s46, 1
        %s243 = scalar_lea.sflag [#allocation4], %s242
        %s244 = sand.u32 %s46, 1
        %s245 = smul.addr %s244, 16
        %s246 = scalar_lea.vmem [#allocation3], %s245
        // Predicated region
        $region37: #{tpu_custom_call.1} parent=35 // pred_check
          %p247 = pneg %p59
        $region38: #{tpu_custom_call.1} parent=35 // pred_check_branch
          %249 = sbr.rel (%p247) target = $region40
        $region39: #{tpu_custom_call.1} parent=35 // pred_region
          %250 = dma.done %s243, 256
        $region40: #{tpu_custom_call.1} parent=35 // pred_fallthru
          _
        %s251 = sand.u32 %s78, 1
        %s252 = scalar_lea.sflag [#allocation7], %s251
        %s253 = sand.u32 %s78, 1
        %s254 = smul.addr %s253, 8
        %s255 = scalar_lea.vmem [#allocation6], %s254
        // Predicated region
        $region41: #{tpu_custom_call.1} parent=35 // pred_check
          %p256 = pneg %p91
        $region42: #{tpu_custom_call.1} parent=35 // pred_check_branch
          %258 = sbr.rel (%p256) target = $region44
        $region43: #{tpu_custom_call.1} parent=35 // pred_region
          %259 = dma.done %s252, 128
        $region44: #{tpu_custom_call.1} parent=35 // pred_fallthru
          _
        %s260 = sand.u32 %s46, 1
        %s261 = scalar_lea.sflag [#allocation4], %s260
        %s262 = sand.u32 %s46, 1
        %s263 = smul.addr %s262, 16
        %s264 = scalar_lea.vmem [#allocation3], %s263
        %p265 = pneg %p59
        %p266 = pneg %p56
        %s267 = sand.u32 %s78, 1
        %s268 = scalar_lea.sflag [#allocation7], %s267
        %s269 = sand.u32 %s78, 1
        %s270 = smul.addr %s269, 8
        %s271 = scalar_lea.vmem [#allocation6], %s270
        %p272 = pneg %p91
        %p273 = pneg %p88
        %p274 = pneg %p112
        %p275 = pneg %p109
        %p276 = pneg %p133
        %p277 = pneg %p130
        %p278 = pneg %p161
        %p279 = pneg %p158
        %s280 = sand.u32 %s148, 1
        %s281 = scalar_lea.sflag [#allocation5], %s280
        %s282 = sand.u32 %s148, 1
        %s283 = smul.addr %s282, 16
        %s284 = scalar_lea.vmem [#allocation8], %s283
        %s285 = smul.u32 2, %s29
        %s286 = ssub.s32 3, %s285
        %p287 = scmp.lt.s32.totalorder %s286, 2
        %s288 = scalar_select %p287, %s286, 2
        %s289 = smul.u32 128, %s288
        %s290 = sadd.s32 %s29, 1
        %s291 = smul.u32 %s290, 2
        %s292 = smul.u32 2, %s29
        %v293 = vld [vmem:[%s246] sm:$0xff]
        %v294 = vld [vmem:[%s246 + $0x8] sm:$0xff]
        %v295 = vld [vmem:[%s255] sm:$0xff]
        %v296 = vlaneseq
        %v297 = vand.u32 %v296, 127
        %v298 = vadd.s32 %v297, 128
        %vm299 = vcmp.lt.s32.totalorder %v297, 0
        %v300 = vsub.s32 0, %v297
        %v301 = vsel %vm299, %v300, %v297
        %v302 = vshrl.u32 %v301, 4
        %v303 = vand.u32 %v301, 15
        %v304 = vsub.s32 0, %v303
        %v305 = vsel %vm299, %v304, %v303
        %vm306 = vcmp.lt.s32.totalorder %v298, 0
        %v307 = vsub.s32 0, %v298
        %v308 = vsel %vm306, %v307, %v298
        %v309 = vshrl.u32 %v308, 4
        %v310 = vand.u32 %v308, 15
        %v311 = vsub.s32 0, %v310
        %v312 = vsel %vm306, %v311, %v310
        %vm313 = vcmp.ne.s32.totalorder %v305, 0
        %vm314 = vcmp.ne.s32.totalorder %v312, 0
        %vm315 = vcmp.lt.s32.totalorder %v305, 0
        %vm316 = vcmp.lt.s32.totalorder %v312, 0
        %vm317 = vmand %vm315, %vm313
        %vm318 = vmand %vm316, %vm314
        %v319 = vadd.s32 %v305, 16
        %v320 = vadd.s32 %v312, 16
        %v321 = vsel %vm317, %v319, %v305
        %v322 = vsel %vm318, %v320, %v312
        %323 = vrot.lane.b32.xlu0 %v293, 1
        %v324 = vpop.permute.xlu0 %323
        %325 = vrot.lane.b32.xlu0 %v294, 1
        %v326 = vpop.permute.xlu0 %325
        %vm327 = vcmp.lt.s32.totalorder %v297, 1
        %v328 = vsel %vm327, %v324, %v326
        %v329 = vsel %vm327, %v326, %v324
        %330 = vrot.lane.b32.xlu0 %v293, 127
        %v331 = vpop.permute.xlu0 %330
        %332 = vrot.lane.b32.xlu0 %v294, 127
        %v333 = vpop.permute.xlu0 %332
        %vm334 = vcmp.lt.s32.totalorder %v297, 127
        %v335 = vsel %vm334, %v331, %v333
        %v336 = vsel %vm334, %v333, %v331
        %vm337 = vcmp.eq.s32.totalorder %v321, 0
        %vm338 = vcmp.eq.s32.totalorder %v322, 0
        %v339 = vsel %vm337, 1, 0
        %v340 = vsel %vm338, 1, 0
        %vm341 = vcmp.eq.s32.totalorder %v339, 1
        %vm342 = vcmp.eq.s32.totalorder %v340, 1
        %v343 = vsel %vm341, %v335, %v329
        %v344 = vsel %vm342, %v336, %v328
        %345 = vst [vmem:[#allocation2] sm:$0xff] %v343
        %346 = vst [vmem:[#allocation2 + $0x8] sm:$0xff] %v344
        %347 = vst [vmem:[#allocation2 + $0x10] sm:$0xff] %v293
        %348 = vst [vmem:[#allocation2 + $0x18] sm:$0xff] %v294
        %vm349 = vcmp.eq.s32.totalorder %v321, 15
        %vm350 = vcmp.eq.s32.totalorder %v322, 15
        %v351 = vsel %vm349, 1, 0
        %v352 = vsel %vm350, 1, 0
        %vm353 = vcmp.eq.s32.totalorder %v351, 1
        %vm354 = vcmp.eq.s32.totalorder %v352, 1
        %v355 = vsel %vm353, %v329, %v335
        %v356 = vsel %vm354, %v328, %v336
        %357 = vst [vmem:[#allocation2 + $0x20] sm:$0xff] %v355
        %358 = vst [vmem:[#allocation2 + $0x28] sm:$0xff] %v356
        %362 = vrot.lane.b32.xlu0 %v293, 112
        %v363 = vpop.permute.xlu0 %362
        %364 = vrot.lane.b32.xlu0 %v294, 112
        %v365 = vpop.permute.xlu0 %364
        %366 = vrot.lane.b32.xlu0 %v295, 112
        %v367 = vpop.permute.xlu0 %366
        %vm368 = vcmask 916480
        %v369 = vsel %vm368, %v363, %v365
        %v370 = vsel %vm368, %v365, %v367
        %373 = vrot.lane.b32.xlu0 %v369, 1
        %v374 = vpop.permute.xlu0 %373
        %375 = vrot.lane.b32.xlu0 %v370, 1
        %v376 = vpop.permute.xlu0 %375
        %v377 = vsel %vm327, %v374, %v376
        %v378 = vsel %vm327, %v376, %v374
        %379 = vrot.lane.b32.xlu0 %v369, 127
        %v380 = vpop.permute.xlu0 %379
        %381 = vrot.lane.b32.xlu0 %v370, 127
        %v382 = vpop.permute.xlu0 %381
        %v383 = vsel %vm334, %v380, %v382
        %v384 = vsel %vm334, %v382, %v380
        %v385 = vsel %vm341, %v383, %v378
        %v386 = vsel %vm342, %v384, %v377
        %387 = vst [vmem:[#allocation2 + $0x30] sm:$0xff] %v385
        %388 = vst [vmem:[#allocation2 + $0x38] sm:$0xff] %v386
        %389 = vst [vmem:[#allocation2 + $0x40] sm:$0xff] %v369
        %390 = vst [vmem:[#allocation2 + $0x48] sm:$0xff] %v370
        %v391 = vsel %vm353, %v378, %v383
        %v392 = vsel %vm354, %v377, %v384
        %393 = vst [vmem:[#allocation2 + $0x50] sm:$0xff] %v391
        %394 = vst [vmem:[#allocation2 + $0x58] sm:$0xff] %v392
        %395 = vrot.lane.b32.xlu0 %v293, 96
        %v396 = vpop.permute.xlu0 %395
        %397 = vrot.lane.b32.xlu0 %v294, 96
        %v398 = vpop.permute.xlu0 %397
        %399 = vrot.lane.b32.xlu0 %v295, 96
        %v400 = vpop.permute.xlu0 %399
        %vm401 = vcmask 785408
        %v402 = vsel %vm401, %v396, %v398
        %v403 = vsel %vm401, %v398, %v400
        %406 = vrot.lane.b32.xlu0 %v402, 1
        %v407 = vpop.permute.xlu0 %406
        %408 = vrot.lane.b32.xlu0 %v403, 1
        %v409 = vpop.permute.xlu0 %408
        %v410 = vsel %vm327, %v407, %v409
        %v411 = vsel %vm327, %v409, %v407
        %412 = vrot.lane.b32.xlu0 %v402, 127
        %v413 = vpop.permute.xlu0 %412
        %414 = vrot.lane.b32.xlu0 %v403, 127
        %v415 = vpop.permute.xlu0 %414
        %v416 = vsel %vm334, %v413, %v415
        %v417 = vsel %vm334, %v415, %v413
        %v418 = vsel %vm341, %v416, %v411
        %v419 = vsel %vm342, %v417, %v410
        %420 = vst [vmem:[#allocation2 + $0x60] sm:$0xff] %v418
        %421 = vst [vmem:[#allocation2 + $0x68] sm:$0xff] %v419
        %422 = vst [vmem:[#allocation2 + $0x70] sm:$0xff] %v402
        %423 = vst [vmem:[#allocation2 + $0x78] sm:$0xff] %v403
        %v424 = vsel %vm353, %v411, %v416
        %v425 = vsel %vm354, %v410, %v417
        %426 = vst [vmem:[#allocation2 + $0x80] sm:$0xff] %v424
        %427 = vst [vmem:[#allocation2 + $0x88] sm:$0xff] %v425
        %v428 = vld [vmem:[%s2] sm:$0xff]
        %v429 = vld [vmem:[#allocation2] sm:$0xff]
        %v430 = vld [vmem:[#allocation2 + $0x8] sm:$0xff]
        %v431 = vld [vmem:[#allocation2 + $0x10] sm:$0xff]
        %v432 = vld [vmem:[#allocation2 + $0x18] sm:$0xff]
        %v433 = vld [vmem:[#allocation2 + $0x20] sm:$0xff]
        %v434 = vld [vmem:[#allocation2 + $0x28] sm:$0xff]
        %v435 = vld [vmem:[#allocation2 + $0x30] sm:$0xff]
        %v436 = vld [vmem:[#allocation2 + $0x38] sm:$0xff]
        %v437 = vld [vmem:[#allocation2 + $0x40] sm:$0xff]
        %v438 = vld [vmem:[#allocation2 + $0x48] sm:$0xff]
        %v439 = vld [vmem:[#allocation2 + $0x50] sm:$0xff]
        %v440 = vld [vmem:[#allocation2 + $0x58] sm:$0xff]
        %v441 = vld [vmem:[#allocation2 + $0x60] sm:$0xff]
        %v442 = vld [vmem:[#allocation2 + $0x68] sm:$0xff]
        %v443 = vld [vmem:[#allocation2 + $0x70] sm:$0xff]
        %v444 = vld [vmem:[#allocation2 + $0x78] sm:$0xff]
        %v445 = vld [vmem:[#allocation2 + $0x80] sm:$0xff]
        %v446 = vld [vmem:[#allocation2 + $0x88] sm:$0xff]
        %v447 = vld [vmem:[%s3] sm:$0xff]
        %449 = vset.pattern.permute.xlu0 0
        %450 = vperm.xlu0 %449, %v447
        %v451 = vpop.permute.xlu0 %450
        %vm453 = vcmask 588800
        %v455 = vsel %vm453, %v428, 0
        %457 = vmatprep.subr.mxu0 %v430
        %458 = vmatpush1.msra.mxu0 %v429
        %459 = vmatprep.subr.mxu0 %v432
        %460 = vmatpush1.msra.mxu0 %v431
        %461 = vmatprep.subr.mxu0 %v434
        %462 = vmatpush1.msra.mxu0 %v433
        %463 = vmatprep.subr.mxu0 %v436
        %464 = vmatpush1.msra.mxu0 %v435
        %465 = vmatprep.subr.mxu0 %v438
        %466 = vmatpush1.msra.mxu0 %v437
        %467 = vmatprep.subr.mxu0 %v440
        %468 = vmatpush1.msra.mxu0 %v439
        %469 = vmatprep.subr.mxu0 %v442
        %470 = vmatpush1.msra.mxu0 %v441
        %471 = vmatprep.subr.mxu0 %v444
        %472 = vmatpush1.msra.mxu0 %v443
        %473 = vmatprep.subr.mxu0 %v446
        %474 = vmatpush1.msra.mxu0 %v445
        %475 = vmatprep.subr.mxu0 0.0
        %476 = vmatpush1.msra.mxu0 0.0
        %477 = vmatprep.subr.mxu0 0.0
        %478 = vmatpush1.msra.mxu0 0.0
        %479 = vmatprep.subr.mxu0 0.0
        %480 = vmatpush1.msra.mxu0 0.0
        %481 = vmatprep.subr.mxu0 0.0
        %482 = vmatpush1.msra.mxu0 0.0
        %483 = vmatprep.subr.mxu0 0.0
        %484 = vmatpush1.msra.mxu0 0.0
        %485 = vmatprep.subr.mxu0 0.0
        %486 = vmatpush1.msra.mxu0 0.0
        %487 = vmatprep.subr.mxu0 0.0
        %488 = vmatpush1.msra.mxu0 0.0
        %489 = vmatprep.subr.mxu0 0.0
        %490 = vmatpush1.msra.mxu0 0.0
        %491 = vmatprep.subr.mxu0 0.0
        %492 = vmatpush1.msra.mxu0 0.0
        %493 = vmatprep.subr.mxu0 0.0
        %494 = vmatpush1.msra.mxu0 0.0
        %495 = vmatprep.subr.mxu0 0.0
        %496 = vmatpush1.msra.mxu0 0.0
        %497 = vmatprep.subr.mxu0 0.0
        %498 = vmatpush1.msra.mxu0 0.0
        %499 = vmatprep.subr.mxu0 0.0
        %500 = vmatpush1.msra.mxu0 0.0
        %501 = vmatprep.subr.mxu0 0.0
        %502 = vmatpush1.msra.mxu0 0.0
        %503 = vmatprep.subr.mxu0 0.0
        %504 = vmatpush1.msra.mxu0 0.0
        %505 = vmatprep.subr.mxu0 0.0
        %506 = vmatpush1.msra.mxu0 0.0
        %507 = vmatprep.subr.mxu0 0.0
        %508 = vmatpush1.msra.mxu0 0.0
        %509 = vmatprep.subr.mxu0 0.0
        %510 = vmatpush1.msra.mxu0 0.0
        %511 = vmatprep.subr.mxu0 0.0
        %512 = vmatpush1.msra.mxu0 0.0
        %513 = vmatprep.subr.mxu0 0.0
        %514 = vmatpush1.msra.mxu0 0.0
        %515 = vmatprep.subr.mxu0 0.0
        %516 = vmatpush1.msra.mxu0 0.0
        %517 = vmatprep.subr.mxu0 0.0
        %518 = vmatpush1.msra.mxu0 0.0
        %519 = vmatprep.subr.mxu0 0.0
        %520 = vmatpush1.msra.mxu0 0.0
        %521 = vmatprep.mubr.f32.mxu0 0.0
        %522 = vmatmul.mubr.f32.gmra.mrb[0].mxu0 %v455
        %v523 = vpop.f32.mrb[0].mxu0
        %v524 = vadd.f32 %v451, %v523
        %v525 = vpop.f32.mrb[0].mxu0
        %v526 = vadd.f32 %v451, %v525
        %527 = vdwg.mxu0
        %528 = vst [vmem:[%s284] sm:$0xff] %v524
        %529 = vst [vmem:[%s284 + $0x8] sm:$0xff] %v526
        %s530 = sand.u32 %s148, 1
        %s531 = scalar_lea.sflag [#allocation5], %s530
        %s532 = sand.u32 %s148, 1
        %s533 = smul.addr %s532, 16
        %s534 = scalar_lea.vmem [#allocation8], %s533
        // Predicated region
        $region45: #{tpu_custom_call.1} parent=35 // pred_check
          %p535 = pneg %p158
        $region46: #{tpu_custom_call.1} parent=35 // pred_check_branch
          %537 = sbr.rel (%p535) target = $region48
        $region47: #{tpu_custom_call.1} parent=35 // pred_region
          %s538 = smul.u32 2, %s29
          %s540 = ssub.s32 256, 256
          %541 = vsyncadd %s531, %s540
          %s542 = smul.addr %s28, 2
          %s543 = sadd.s32 %s538, %s542
          %s544 = smul.addr %s543, 128
          %s545 = scalar_lea.hbm %s4, %s544
          %s547 = sshll.u32 %s534, 4
          %s548 = int_to_ptr.vmem [resolvable:$true] %s547
          %550 = dma.vmem_to_hbm [thread:$0]  %s548, 256, %s545, %s531
        $region48: #{tpu_custom_call.1} parent=35 // pred_fallthru
          _
      $region36: #{tpu_custom_call.1} parent=5 // pred_fallthru
        _
      %p551 = scmp.le.s32.totalorder 2, %s19
      // Predicated region
      $region49: #{tpu_custom_call.1} parent=5 // pred_check
        %p552 = pneg %p551
      $region50: #{tpu_custom_call.1} parent=5 // pred_check_branch
        %554 = sbr.rel (%p552) target = $region52
      $region51: #{tpu_custom_call.1} parent=5 // pred_region
        %s555 = ssub.s32 %s19, 2
        // Predicated region
        $region53: #{tpu_custom_call.1} parent=51 // pred_check
          %p556 = pneg %p164
        $region54: #{tpu_custom_call.1} parent=51 // pred_check_branch
          %558 = sbr.rel (%p556) target = $region56
        $region55: #{tpu_custom_call.1} parent=51 // pred_region
          %s559 = sand.u32 %s149, 1
          %s560 = scalar_lea.sflag [#allocation5], %s559
          %s561 = sand.u32 %s149, 1
          %s562 = smul.addr %s561, 16
          %s563 = scalar_lea.vmem [#allocation8], %s562
          %564 = dma.done %s560, 256
        $region56: #{tpu_custom_call.1} parent=51 // pred_fallthru
          _
      $region52: #{tpu_custom_call.1} parent=5 // pred_fallthru
        _
    $region6: #{tpu_custom_call.1} parent=1 // loop_footer
      %s23 = sadd.s32 1, %s19
    $region7: #{tpu_custom_call.1} parent=1 // loop_footer_branch
      %18 = sbr.rel target = $region3
    $region8: #{tpu_custom_call.1} parent=1 // loop_exit
      _
    %565 = vsyncpa [#allocation4], 1
    %s566 = scalar_lea.sflag [#allocation4], 1
    %567 = vsyncpa %s566, 1
    %568 = vsyncpa [#allocation7], 1
    %s569 = scalar_lea.sflag [#allocation7], 1
    %570 = vsyncpa %s569, 1
    %571 = vsyncpa [#allocation5], 1
    %s572 = scalar_lea.sflag [#allocation5], 1
    %573 = vsyncpa %s572, 1

// kernel: tpu_custom_call.1
$region0: #{tpu_custom_call.1}
  #allocation0 [shape = 'u32[]', space=smem, size = 0x4, offset = 0x4, fixed_abs, tag = 'smem constant byte address 0x4 - core index']
  #allocation1 [shape = 'u32[144,128]{1,0:T(1,128)}', space=vmem, size = 0x12000, scoped, tag = 'internal scratch']
  #allocation2 [shape = 'f32[72,256]{1,0:T(8,128)}', space=vmem, size = 0x12000, scoped, tag = 'scratch operand']
  %s0 = inlined_call_operand.hbm [shape: f32[2,8,384], index: 0, kind: input, shape index: {}]
  %s1 = inlined_call_operand.hbm [shape: f32[2,8,384], index: 1, kind: input, shape index: {}]
  %s2 = inlined_call_operand.vmem [shape: f32[8,72], index: 2, kind: input, shape index: {}]
  %s3 = inlined_call_operand.vmem [shape: f32[8,1], index: 3, kind: input, shape index: {}]
  %s4 = inlined_call_operand.hbm [shape: f32[2,8,256], index: 4, kind: output, shape index: {}]
  %s5 = sld [smem:[#allocation0]]
  $region57: #{tpu_custom_call.1} parent=0
    _
  %s7 = ssub.s32 1, %s5
  %s8 = scalar_select 0, %s7, %s5
  $region1: #{tpu_custom_call.1} parent=0
    #allocation3 [shape = 'u8[16384]{0}', space=vmem, size = 0x4000, scoped, tag = 'input window, operand 0']
    #allocation4 [shape = 's32[2]{0}', space=sflag, size = 0x8, scoped, tag = 'scoped memory for tpu_custom_call.1']
    #allocation5 [shape = 's32[2]{0}', space=sflag, size = 0x8, scoped, tag = 'scoped memory for tpu_custom_call.1']
    #allocation6 [shape = 'u8[8192]{0}', space=vmem, size = 0x2000, scoped, tag = 'input window, operand 1']
    #allocation7 [shape = 's32[2]{0}', space=sflag, size = 0x8, scoped, tag = 'scoped memory for tpu_custom_call.1']
    #allocation8 [shape = 'u8[16384]{0}', space=vmem, size = 0x4000, scoped, tag = 'output window, operand 0']
    %9 = vsyncpa [#allocation4], 0
    %s10 = scalar_lea.sflag [#allocation4], 1
    %11 = vsyncpa %s10, 0
    %12 = vsyncpa [#allocation7], 0
    %s13 = scalar_lea.sflag [#allocation7], 1
    %14 = vsyncpa %s13, 0
    %15 = vsyncpa [#allocation5], 0
    %s16 = scalar_lea.sflag [#allocation5], 1
    %17 = vsyncpa %s16, 0
    loop: start=0, step=1, limit=4
    $region2: #{tpu_custom_call.1} parent=1 // loop_pre_header
      _
    $region3: #{tpu_custom_call.1} parent=1 // loop_header
      %s19 = sphi 0, %s23
      %p20 = scmp.ge.s32.totalorder %s19, 4
      %s26 = sphi 0, %s38
      %s27 = sphi 0, %s34
      %s28 = sphi 0, %s26
      %s29 = sphi 0, %s27
      %s30 = sphi 0, %s28
      %s31 = sphi 0, %s29
      %s43 = sphi 0, %s45
      %s46 = sphi 0, %s43
      %s47 = sphi 0, %s46
      %s63 = sphi 0, %s47
      %s75 = sphi 0, %s77
      %s78 = sphi 0, %s75
      %s79 = sphi 0, %s78
      %s95 = sphi 0, %s79
      %s99 = sphi 0, %s99
      %s101 = sphi 0, %s99
      %s102 = sphi 0, %s101
      %s116 = sphi 0, %s102
      %s120 = sphi 0, %s120
      %s122 = sphi 0, %s120
      %s123 = sphi 0, %s122
      %s137 = sphi 0, %s123
      %s145 = sphi 0, %s147
      %s148 = sphi 0, %s145
      %s149 = sphi 0, %s148
      %s165 = sphi 0, %s149
    $region4: #{tpu_custom_call.1} parent=1 // loop_header_branch
      %22 = sbr.rel (%p20) target = $region8
    $region5: #{tpu_custom_call.1} parent=1 // loop_body
      %s24 = ssub.s32 %s19, 1
      %s25 = ssub.s32 %s19, 2
      %s32 = sadd.s32 1, %s27
      %p33 = scmp.ge.s32.totalorder %s32, 1
      %s34 = scalar_select %p33, 0, %s32
      %s35 = sadd.s32 1, %s26
      %s36 = scalar_select %p33, %s35, %s26
      %p37 = scmp.ge.s32.totalorder %s36, 2
      %s38 = scalar_select %p37, 0, %s36
      %s39 = ssub.s32 %s26, %s38
      %s40 = ssub.s32 %s27, %s34
      %s41 = sor.u32 %s39, %s40
      %p42 = scmp.eq.s32.totalorder %s41, 0
      %s44 = sadd.s32 %s43, 1
      %s45 = scalar_select %p42, %s43, %s44
      %p48 = pneg %p42
      %p49 = scmp.eq.s32.totalorder %s19, 1
      %p50 = por %p48, %p49
      %p51 = scmp.ne.s32.totalorder %s43, %s46
      %p52 = scmp.eq.s32.totalorder %s19, 0
      %p53 = por %p51, %p52
      %p54 = scmp.ne.s32.totalorder %s43, %s46
      %p55 = scmp.eq.s32.totalorder %s24, 1
      %p56 = por %p54, %p55
      %p57 = scmp.ne.s32.totalorder %s46, %s47
      %p58 = scmp.eq.s32.totalorder %s24, 0
      %p59 = por %p57, %p58
      %p60 = scmp.ne.s32.totalorder %s46, %s47
      %p61 = scmp.eq.s32.totalorder %s25, 1
      %p62 = por %p60, %p61
      %p64 = scmp.ne.s32.totalorder %s47, %s63
      %p65 = scmp.eq.s32.totalorder %s25, 0
      %p66 = por %p64, %p65
      %s67 = sadd.s32 %s27, 1
      %s68 = smul.u32 %s67, 2
      %s69 = sadd.s32 %s34, 1
      %s70 = smul.u32 %s69, 2
      %s71 = ssub.s32 %s26, %s38
      %s72 = ssub.s32 %s68, %s70
      %s73 = sor.u32 %s71, %s72
      %p74 = scmp.eq.s32.totalorder %s73, 0
      %s76 = sadd.s32 %s75, 1
      %s77 = scalar_select %p74, %s75, %s76
      %p80 = pneg %p74
      %p81 = scmp.eq.s32.totalorder %s19, 1
      %p82 = por %p80, %p81
      %p83 = scmp.ne.s32.totalorder %s75, %s78
      %p84 = scmp.eq.s32.totalorder %s19, 0
      %p85 = por %p83, %p84
      %p86 = scmp.ne.s32.totalorder %s75, %s78
      %p87 = scmp.eq.s32.totalorder %s24, 1
      %p88 = por %p86, %p87
      %p89 = scmp.ne.s32.totalorder %s78, %s79
      %p90 = scmp.eq.s32.totalorder %s24, 0
      %p91 = por %p89, %p90
      %p92 = scmp.ne.s32.totalorder %s78, %s79
      %p93 = scmp.eq.s32.totalorder %s25, 1
      %p94 = por %p92, %p93
      %p96 = scmp.ne.s32.totalorder %s79, %s95
      %p97 = scmp.eq.s32.totalorder %s25, 0
      %p98 = por %p96, %p97
      %s100 = sadd.s32 %s99, 1
      %p103 = scmp.eq.s32.totalorder %s19, 1
      %p104 = scmp.ne.s32.totalorder %s99, %s101
      %p105 = scmp.eq.s32.totalorder %s19, 0
      %p106 = por %p104, %p105
      %p107 = scmp.ne.s32.totalorder %s99, %s101
      %p108 = scmp.eq.s32.totalorder %s24, 1
      %p109 = por %p107, %p108
      %p110 = scmp.ne.s32.totalorder %s101, %s102
      %p111 = scmp.eq.s32.totalorder %s24, 0
      %p112 = por %p110, %p111
      %p113 = scmp.ne.s32.totalorder %s101, %s102
      %p114 = scmp.eq.s32.totalorder %s25, 1
      %p115 = por %p113, %p114
      %p117 = scmp.ne.s32.totalorder %s102, %s116
      %p118 = scmp.eq.s32.totalorder %s25, 0
      %p119 = por %p117, %p118
      %s121 = sadd.s32 %s120, 1
      %p124 = scmp.eq.s32.totalorder %s19, 1
      %p125 = scmp.ne.s32.totalorder %s120, %s122
      %p126 = scmp.eq.s32.totalorder %s19, 0
      %p127 = por %p125, %p126
      %p128 = scmp.ne.s32.totalorder %s120, %s122
      %p129 = scmp.eq.s32.totalorder %s24, 1
      %p130 = por %p128, %p129
      %p131 = scmp.ne.s32.totalorder %s122, %s123
      %p132 = scmp.eq.s32.totalorder %s24, 0
      %p133 = por %p131, %p132
      %p134 = scmp.ne.s32.totalorder %s122, %s123
      %p135 = scmp.eq.s32.totalorder %s25, 1
      %p136 = por %p134, %p135
      %p138 = scmp.ne.s32.totalorder %s123, %s137
      %p139 = scmp.eq.s32.totalorder %s25, 0
      %p140 = por %p138, %p139
      %s141 = ssub.s32 %s26, %s38
      %s142 = ssub.s32 %s27, %s34
      %s143 = sor.u32 %s141, %s142
      %p144 = scmp.eq.s32.totalorder %s143, 0
      %s146 = sadd.s32 %s145, 1
      %s147 = scalar_select %p144, %s145, %s146
      %p150 = pneg %p144
      %p151 = scmp.eq.s32.totalorder %s19, 1
      %p152 = por %p150, %p151
      %p153 = scmp.ne.s32.totalorder %s145, %s148
      %p154 = scmp.eq.s32.totalorder %s19, 0
      %p155 = por %p153, %p154
      %p156 = scmp.ne.s32.totalorder %s145, %s148
      %p157 = scmp.eq.s32.totalorder %s24, 1
      %p158 = por %p156, %p157
      %p159 = scmp.ne.s32.totalorder %s148, %s149
      %p160 = scmp.eq.s32.totalorder %s24, 0
      %p161 = por %p159, %p160
      %p162 = scmp.ne.s32.totalorder %s148, %s149
      %p163 = scmp.eq.s32.totalorder %s25, 1
      %p164 = por %p162, %p163
      %p166 = scmp.ne.s32.totalorder %s149, %s165
      %p167 = scmp.eq.s32.totalorder %s25, 0
      %p168 = por %p166, %p167
      %p169 = scmp.le.s32.totalorder 1, %s19
      %p170 = scmp.lt.s32.totalorder %s19, 3
      %p171 = pnand %p169, %p170
      %p172 = pneg %p171
      // Predicated region
      $region9: #{tpu_custom_call.1} parent=5 // pred_check
        _
      $region10: #{tpu_custom_call.1} parent=5 // pred_check_branch
        %174 = sbr.rel (%p171) target = $region12
      $region11: #{tpu_custom_call.1} parent=5 // pred_region
        %s175 = ssub.s32 %s19, 1
        // Predicated region
        $region13: #{tpu_custom_call.1} parent=11 // pred_check
          %p176 = pneg %p112
        $region14: #{tpu_custom_call.1} parent=11 // pred_check_branch
          %178 = sbr.rel (%p176) target = $region16
        $region15: #{tpu_custom_call.1} parent=11 // pred_region
          _
        $region16: #{tpu_custom_call.1} parent=11 // pred_fallthru
          _
        // Predicated region
        $region17: #{tpu_custom_call.1} parent=11 // pred_check
          %p179 = pneg %p133
        $region18: #{tpu_custom_call.1} parent=11 // pred_check_branch
          %181 = sbr.rel (%p179) target = $region20
        $region19: #{tpu_custom_call.1} parent=11 // pred_region
          _
        $region20: #{tpu_custom_call.1} parent=11 // pred_fallthru
          _
      $region12: #{tpu_custom_call.1} parent=5 // pred_fallthru
        _
      %p182 = scmp.lt.s32.totalorder %s19, 2
      // Predicated region
      $region21: #{tpu_custom_call.1} parent=5 // pred_check
        %p183 = pneg %p182
      $region22: #{tpu_custom_call.1} parent=5 // pred_check_branch
        %185 = sbr.rel (%p183) target = $region24
      $region23: #{tpu_custom_call.1} parent=5 // pred_region
        // Predicated region
        $region25: #{tpu_custom_call.1} parent=23 // pred_check
          %p186 = pneg %p53
        $region26: #{tpu_custom_call.1} parent=23 // pred_check_branch
          %188 = sbr.rel (%p186) target = $region28
        $region27: #{tpu_custom_call.1} parent=23 // pred_region
          %s189 = sand.u32 %s43, 1
          %s190 = scalar_lea.sflag [#allocation4], %s189
          %s191 = sand.u32 %s43, 1
          %s192 = smul.addr %s191, 16
          %s193 = scalar_lea.vmem [#allocation3], %s192
          %s194 = smul.u32 2, %s27
          %s195 = ssub.s32 3, %s194
          %p196 = scmp.lt.s32.totalorder %s195, 2
          %s197 = scalar_select %p196, %s195, 2
          %s198 = smul.u32 128, %s197
          %s200 = ssub.s32 256, %s198
          %201 = vsyncadd %s190, %s200
          %p202 = scmp.ne.s32.totalorder 0, %s198
          %s203 = smul.addr %s26, 3
          %s204 = sadd.s32 %s194, %s203
          %s205 = smul.addr %s204, 128
          %s206 = scalar_lea.hbm %s0, %s205
          %s207 = smul.u32 %s197, 8
          %s208 = sshll.u32 %s207, 4
          %s209 = sshll.u32 %s193, 4
          %s210 = int_to_ptr.vmem [resolvable:$true] %s209
          %212 = dma.hbm_to_vmem [thread:$0]  (%p202), %s206, %s208, %s210, %s190
        $region28: #{tpu_custom_call.1} parent=23 // pred_fallthru
          _
        // Predicated region
        $region29: #{tpu_custom_call.1} parent=23 // pred_check
          %p213 = pneg %p85
        $region30: #{tpu_custom_call.1} parent=23 // pred_check_branch
          %215 = sbr.rel (%p213) target = $region32
        $region31: #{tpu_custom_call.1} parent=23 // pred_region
          %s216 = sand.u32 %s75, 1
          %s217 = scalar_lea.sflag [#allocation7], %s216
          %s218 = sand.u32 %s75, 1
          %s219 = smul.addr %s218, 8
          %s220 = scalar_lea.vmem [#allocation6], %s219
          %s221 = sadd.s32 %s27, 1
          %s222 = smul.u32 %s221, 2
          %s224 = ssub.s32 128, 128
          %225 = vsyncadd %s217, %s224
          %s226 = smul.addr %s26, 3
          %s227 = sadd.s32 %s222, %s226
          %s228 = smul.addr %s227, 128
          %s229 = scalar_lea.hbm %s1, %s228
          %s231 = sshll.u32 %s220, 4
          %s232 = int_to_ptr.vmem [resolvable:$true] %s231
          %234 = dma.hbm_to_vmem [thread:$0]  %s229, 128, %s232, %s217
        $region32: #{tpu_custom_call.1} parent=23 // pred_fallthru
          _
      $region24: #{tpu_custom_call.1} parent=5 // pred_fallthru
        _
      %p235 = scmp.le.s32.totalorder 1, %s19
      %p236 = scmp.lt.s32.totalorder %s19, 3
      %p237 = pnand %p235, %p236
      %p238 = pneg %p237
      // Predicated region
      $region33: #{tpu_custom_call.1} parent=5 // pred_check
        _
      $region34: #{tpu_custom_call.1} parent=5 // pred_check_branch
        %240 = sbr.rel (%p237) target = $region36
      $region35: #{tpu_custom_call.1} parent=5 // pred_region
        %s241 = ssub.s32 %s19, 1
        %s242 = sand.u32 %s46, 1
        %s243 = scalar_lea.sflag [#allocation4], %s242
        %s244 = sand.u32 %s46, 1
        %s245 = smul.addr %s244, 16
        %s246 = scalar_lea.vmem [#allocation3], %s245
        // Predicated region
        $region37: #{tpu_custom_call.1} parent=35 // pred_check
          %p247 = pneg %p59
        $region38: #{tpu_custom_call.1} parent=35 // pred_check_branch
          %249 = sbr.rel (%p247) target = $region40
        $region39: #{tpu_custom_call.1} parent=35 // pred_region
          %250 = dma.done %s243, 256
        $region40: #{tpu_custom_call.1} parent=35 // pred_fallthru
          _
        %s251 = sand.u32 %s78, 1
        %s252 = scalar_lea.sflag [#allocation7], %s251
        %s253 = sand.u32 %s78, 1
        %s254 = smul.addr %s253, 8
        %s255 = scalar_lea.vmem [#allocation6], %s254
        // Predicated region
        $region41: #{tpu_custom_call.1} parent=35 // pred_check
          %p256 = pneg %p91
        $region42: #{tpu_custom_call.1} parent=35 // pred_check_branch
          %258 = sbr.rel (%p256) target = $region44
        $region43: #{tpu_custom_call.1} parent=35 // pred_region
          %259 = dma.done %s252, 128
        $region44: #{tpu_custom_call.1} parent=35 // pred_fallthru
          _
        %s260 = sand.u32 %s46, 1
        %s261 = scalar_lea.sflag [#allocation4], %s260
        %s262 = sand.u32 %s46, 1
        %s263 = smul.addr %s262, 16
        %s264 = scalar_lea.vmem [#allocation3], %s263
        %p265 = pneg %p59
        %p266 = pneg %p56
        %s267 = sand.u32 %s78, 1
        %s268 = scalar_lea.sflag [#allocation7], %s267
        %s269 = sand.u32 %s78, 1
        %s270 = smul.addr %s269, 8
        %s271 = scalar_lea.vmem [#allocation6], %s270
        %p272 = pneg %p91
        %p273 = pneg %p88
        %p274 = pneg %p112
        %p275 = pneg %p109
        %p276 = pneg %p133
        %p277 = pneg %p130
        %p278 = pneg %p161
        %p279 = pneg %p158
        %s280 = sand.u32 %s148, 1
        %s281 = scalar_lea.sflag [#allocation5], %s280
        %s282 = sand.u32 %s148, 1
        %s283 = smul.addr %s282, 16
        %s284 = scalar_lea.vmem [#allocation8], %s283
        %s285 = smul.u32 2, %s29
        %s286 = ssub.s32 3, %s285
        %p287 = scmp.lt.s32.totalorder %s286, 2
        %s288 = scalar_select %p287, %s286, 2
        %s289 = smul.u32 128, %s288
        %s290 = sadd.s32 %s29, 1
        %s291 = smul.u32 %s290, 2
        %s292 = smul.u32 2, %s29
        %v293 = vld [vmem:[%s246] sm:$0xff]
        %v294 = vld [vmem:[%s246 + $0x8] sm:$0xff]
        %v295 = vld [vmem:[%s255] sm:$0xff]
        %v296 = vlaneseq
        %v297 = vand.u32 %v296, 127
        %v298 = vadd.s32 %v297, 128
        %vm299 = vcmp.lt.s32.totalorder %v297, 0
        %v300 = vsub.s32 0, %v297
        %v301 = vsel %vm299, %v300, %v297
        %v302 = vshrl.u32 %v301, 4
        %v303 = vand.u32 %v301, 15
        %v304 = vsub.s32 0, %v303
        %v305 = vsel %vm299, %v304, %v303
        %vm306 = vcmp.lt.s32.totalorder %v298, 0
        %v307 = vsub.s32 0, %v298
        %v308 = vsel %vm306, %v307, %v298
        %v309 = vshrl.u32 %v308, 4
        %v310 = vand.u32 %v308, 15
        %v311 = vsub.s32 0, %v310
        %v312 = vsel %vm306, %v311, %v310
        %vm313 = vcmp.ne.s32.totalorder %v305, 0
        %vm314 = vcmp.ne.s32.totalorder %v312, 0
        %vm315 = vcmp.lt.s32.totalorder %v305, 0
        %vm316 = vcmp.lt.s32.totalorder %v312, 0
        %vm317 = vmand %vm315, %vm313
        %vm318 = vmand %vm316, %vm314
        %v319 = vadd.s32 %v305, 16
        %v320 = vadd.s32 %v312, 16
        %v321 = vsel %vm317, %v319, %v305
        %v322 = vsel %vm318, %v320, %v312
        %323 = vrot.lane.b32.xlu0 %v293, 1
        %v324 = vpop.permute.xlu0 %323
        %325 = vrot.lane.b32.xlu0 %v294, 1
        %v326 = vpop.permute.xlu0 %325
        %vm327 = vcmp.lt.s32.totalorder %v297, 1
        %v328 = vsel %vm327, %v324, %v326
        %v329 = vsel %vm327, %v326, %v324
        %330 = vrot.lane.b32.xlu0 %v293, 127
        %v331 = vpop.permute.xlu0 %330
        %332 = vrot.lane.b32.xlu0 %v294, 127
        %v333 = vpop.permute.xlu0 %332
        %vm334 = vcmp.lt.s32.totalorder %v297, 127
        %v335 = vsel %vm334, %v331, %v333
        %v336 = vsel %vm334, %v333, %v331
        %vm337 = vcmp.eq.s32.totalorder %v321, 0
        %vm338 = vcmp.eq.s32.totalorder %v322, 0
        %v339 = vsel %vm337, 1, 0
        %v340 = vsel %vm338, 1, 0
        %vm341 = vcmp.eq.s32.totalorder %v339, 1
        %vm342 = vcmp.eq.s32.totalorder %v340, 1
        %v343 = vsel %vm341, %v335, %v329
        %v344 = vsel %vm342, %v336, %v328
        %345 = vst [vmem:[#allocation2] sm:$0xff] %v343
        %346 = vst [vmem:[#allocation2 + $0x8] sm:$0xff] %v344
        %347 = vst [vmem:[#allocation2 + $0x10] sm:$0xff] %v293
        %348 = vst [vmem:[#allocation2 + $0x18] sm:$0xff] %v294
        %vm349 = vcmp.eq.s32.totalorder %v321, 15
        %vm350 = vcmp.eq.s32.totalorder %v322, 15
        %v351 = vsel %vm349, 1, 0
        %v352 = vsel %vm350, 1, 0
        %vm353 = vcmp.eq.s32.totalorder %v351, 1
        %vm354 = vcmp.eq.s32.totalorder %v352, 1
        %v355 = vsel %vm353, %v329, %v335
        %v356 = vsel %vm354, %v328, %v336
        %357 = vst [vmem:[#allocation2 + $0x20] sm:$0xff] %v355
        %358 = vst [vmem:[#allocation2 + $0x28] sm:$0xff] %v356
        %362 = vrot.lane.b32.xlu0 %v293, 112
        %v363 = vpop.permute.xlu0 %362
        %364 = vrot.lane.b32.xlu0 %v294, 112
        %v365 = vpop.permute.xlu0 %364
        %366 = vrot.lane.b32.xlu0 %v295, 112
        %v367 = vpop.permute.xlu0 %366
        %vm368 = vcmask 916480
        %v369 = vsel %vm368, %v363, %v365
        %v370 = vsel %vm368, %v365, %v367
        %373 = vrot.lane.b32.xlu0 %v369, 1
        %v374 = vpop.permute.xlu0 %373
        %375 = vrot.lane.b32.xlu0 %v370, 1
        %v376 = vpop.permute.xlu0 %375
        %v377 = vsel %vm327, %v374, %v376
        %v378 = vsel %vm327, %v376, %v374
        %379 = vrot.lane.b32.xlu0 %v369, 127
        %v380 = vpop.permute.xlu0 %379
        %381 = vrot.lane.b32.xlu0 %v370, 127
        %v382 = vpop.permute.xlu0 %381
        %v383 = vsel %vm334, %v380, %v382
        %v384 = vsel %vm334, %v382, %v380
        %v385 = vsel %vm341, %v383, %v378
        %v386 = vsel %vm342, %v384, %v377
        %387 = vst [vmem:[#allocation2 + $0x30] sm:$0xff] %v385
        %388 = vst [vmem:[#allocation2 + $0x38] sm:$0xff] %v386
        %389 = vst [vmem:[#allocation2 + $0x40] sm:$0xff] %v369
        %390 = vst [vmem:[#allocation2 + $0x48] sm:$0xff] %v370
        %v391 = vsel %vm353, %v378, %v383
        %v392 = vsel %vm354, %v377, %v384
        %393 = vst [vmem:[#allocation2 + $0x50] sm:$0xff] %v391
        %394 = vst [vmem:[#allocation2 + $0x58] sm:$0xff] %v392
        %395 = vrot.lane.b32.xlu0 %v293, 96
        %v396 = vpop.permute.xlu0 %395
        %397 = vrot.lane.b32.xlu0 %v294, 96
        %v398 = vpop.permute.xlu0 %397
        %399 = vrot.lane.b32.xlu0 %v295, 96
        %v400 = vpop.permute.xlu0 %399
        %vm401 = vcmask 785408
        %v402 = vsel %vm401, %v396, %v398
        %v403 = vsel %vm401, %v398, %v400
        %406 = vrot.lane.b32.xlu0 %v402, 1
        %v407 = vpop.permute.xlu0 %406
        %408 = vrot.lane.b32.xlu0 %v403, 1
        %v409 = vpop.permute.xlu0 %408
        %v410 = vsel %vm327, %v407, %v409
        %v411 = vsel %vm327, %v409, %v407
        %412 = vrot.lane.b32.xlu0 %v402, 127
        %v413 = vpop.permute.xlu0 %412
        %414 = vrot.lane.b32.xlu0 %v403, 127
        %v415 = vpop.permute.xlu0 %414
        %v416 = vsel %vm334, %v413, %v415
        %v417 = vsel %vm334, %v415, %v413
        %v418 = vsel %vm341, %v416, %v411
        %v419 = vsel %vm342, %v417, %v410
        %420 = vst [vmem:[#allocation2 + $0x60] sm:$0xff] %v418
        %421 = vst [vmem:[#allocation2 + $0x68] sm:$0xff] %v419
        %422 = vst [vmem:[#allocation2 + $0x70] sm:$0xff] %v402
        %423 = vst [vmem:[#allocation2 + $0x78] sm:$0xff] %v403
        %v424 = vsel %vm353, %v411, %v416
        %v425 = vsel %vm354, %v410, %v417
        %426 = vst [vmem:[#allocation2 + $0x80] sm:$0xff] %v424
        %427 = vst [vmem:[#allocation2 + $0x88] sm:$0xff] %v425
        %v428 = vld [vmem:[%s2] sm:$0xff]
        %v429 = vld [vmem:[#allocation2] sm:$0xff]
        %v430 = vld [vmem:[#allocation2 + $0x8] sm:$0xff]
        %v431 = vld [vmem:[#allocation2 + $0x10] sm:$0xff]
        %v432 = vld [vmem:[#allocation2 + $0x18] sm:$0xff]
        %v433 = vld [vmem:[#allocation2 + $0x20] sm:$0xff]
        %v434 = vld [vmem:[#allocation2 + $0x28] sm:$0xff]
        %v435 = vld [vmem:[#allocation2 + $0x30] sm:$0xff]
        %v436 = vld [vmem:[#allocation2 + $0x38] sm:$0xff]
        %v437 = vld [vmem:[#allocation2 + $0x40] sm:$0xff]
        %v438 = vld [vmem:[#allocation2 + $0x48] sm:$0xff]
        %v439 = vld [vmem:[#allocation2 + $0x50] sm:$0xff]
        %v440 = vld [vmem:[#allocation2 + $0x58] sm:$0xff]
        %v441 = vld [vmem:[#allocation2 + $0x60] sm:$0xff]
        %v442 = vld [vmem:[#allocation2 + $0x68] sm:$0xff]
        %v443 = vld [vmem:[#allocation2 + $0x70] sm:$0xff]
        %v444 = vld [vmem:[#allocation2 + $0x78] sm:$0xff]
        %v445 = vld [vmem:[#allocation2 + $0x80] sm:$0xff]
        %v446 = vld [vmem:[#allocation2 + $0x88] sm:$0xff]
        %v447 = vld [vmem:[%s3] sm:$0xff]
        %449 = vset.pattern.permute.xlu0 0
        %450 = vperm.xlu0 %449, %v447
        %v451 = vpop.permute.xlu0 %450
        %vm453 = vcmask 588800
        %v455 = vsel %vm453, %v428, 0
        %457 = vmatprep.subr.mxu0 %v430
        %458 = vmatpush1.msra.mxu0 %v429
        %459 = vmatprep.subr.mxu0 %v432
        %460 = vmatpush1.msra.mxu0 %v431
        %461 = vmatprep.subr.mxu0 %v434
        %462 = vmatpush1.msra.mxu0 %v433
        %463 = vmatprep.subr.mxu0 %v436
        %464 = vmatpush1.msra.mxu0 %v435
        %465 = vmatprep.subr.mxu0 %v438
        %466 = vmatpush1.msra.mxu0 %v437
        %467 = vmatprep.subr.mxu0 %v440
        %468 = vmatpush1.msra.mxu0 %v439
        %469 = vmatprep.subr.mxu0 %v442
        %470 = vmatpush1.msra.mxu0 %v441
        %471 = vmatprep.subr.mxu0 %v444
        %472 = vmatpush1.msra.mxu0 %v443
        %473 = vmatprep.subr.mxu0 %v446
        %474 = vmatpush1.msra.mxu0 %v445
        %475 = vmatprep.subr.mxu0 0.0
        %476 = vmatpush1.msra.mxu0 0.0
        %477 = vmatprep.subr.mxu0 0.0
        %478 = vmatpush1.msra.mxu0 0.0
        %479 = vmatprep.subr.mxu0 0.0
        %480 = vmatpush1.msra.mxu0 0.0
        %481 = vmatprep.subr.mxu0 0.0
        %482 = vmatpush1.msra.mxu0 0.0
        %483 = vmatprep.subr.mxu0 0.0
        %484 = vmatpush1.msra.mxu0 0.0
        %485 = vmatprep.subr.mxu0 0.0
        %486 = vmatpush1.msra.mxu0 0.0
        %487 = vmatprep.subr.mxu0 0.0
        %488 = vmatpush1.msra.mxu0 0.0
        %489 = vmatprep.subr.mxu0 0.0
        %490 = vmatpush1.msra.mxu0 0.0
        %491 = vmatprep.subr.mxu0 0.0
        %492 = vmatpush1.msra.mxu0 0.0
        %493 = vmatprep.subr.mxu0 0.0
        %494 = vmatpush1.msra.mxu0 0.0
        %495 = vmatprep.subr.mxu0 0.0
        %496 = vmatpush1.msra.mxu0 0.0
        %497 = vmatprep.subr.mxu0 0.0
        %498 = vmatpush1.msra.mxu0 0.0
        %499 = vmatprep.subr.mxu0 0.0
        %500 = vmatpush1.msra.mxu0 0.0
        %501 = vmatprep.subr.mxu0 0.0
        %502 = vmatpush1.msra.mxu0 0.0
        %503 = vmatprep.subr.mxu0 0.0
        %504 = vmatpush1.msra.mxu0 0.0
        %505 = vmatprep.subr.mxu0 0.0
        %506 = vmatpush1.msra.mxu0 0.0
        %507 = vmatprep.subr.mxu0 0.0
        %508 = vmatpush1.msra.mxu0 0.0
        %509 = vmatprep.subr.mxu0 0.0
        %510 = vmatpush1.msra.mxu0 0.0
        %511 = vmatprep.subr.mxu0 0.0
        %512 = vmatpush1.msra.mxu0 0.0
        %513 = vmatprep.subr.mxu0 0.0
        %514 = vmatpush1.msra.mxu0 0.0
        %515 = vmatprep.subr.mxu0 0.0
        %516 = vmatpush1.msra.mxu0 0.0
        %517 = vmatprep.subr.mxu0 0.0
        %518 = vmatpush1.msra.mxu0 0.0
        %519 = vmatprep.subr.mxu0 0.0
        %520 = vmatpush1.msra.mxu0 0.0
        %521 = vmatprep.mubr.f32.mxu0 0.0
        %522 = vmatmul.mubr.f32.gmra.mrb[0].mxu0 %v455
        %v523 = vpop.f32.mrb[0].mxu0
        %v524 = vadd.f32 %v451, %v523
        %v525 = vpop.f32.mrb[0].mxu0
        %v526 = vadd.f32 %v451, %v525
        %527 = vdwg.mxu0
        %528 = vst [vmem:[%s284] sm:$0xff] %v524
        %529 = vst [vmem:[%s284 + $0x8] sm:$0xff] %v526
        %s530 = sand.u32 %s148, 1
        %s531 = scalar_lea.sflag [#allocation5], %s530
        %s532 = sand.u32 %s148, 1
        %s533 = smul.addr %s532, 16
        %s534 = scalar_lea.vmem [#allocation8], %s533
        // Predicated region
        $region45: #{tpu_custom_call.1} parent=35 // pred_check
          %p535 = pneg %p158
        $region46: #{tpu_custom_call.1} parent=35 // pred_check_branch
          %537 = sbr.rel (%p535) target = $region48
        $region47: #{tpu_custom_call.1} parent=35 // pred_region
          %s538 = smul.u32 2, %s29
          %s540 = ssub.s32 256, 256
          %541 = vsyncadd %s531, %s540
          %s542 = smul.addr %s28, 2
          %s543 = sadd.s32 %s538, %s542
          %s544 = smul.addr %s543, 128
          %s545 = scalar_lea.hbm %s4, %s544
          %s547 = sshll.u32 %s534, 4
          %s548 = int_to_ptr.vmem [resolvable:$true] %s547
          %550 = dma.vmem_to_hbm [thread:$0]  %s548, 256, %s545, %s531
        $region48: #{tpu_custom_call.1} parent=35 // pred_fallthru
          _
      $region36: #{tpu_custom_call.1} parent=5 // pred_fallthru
        _
      %p551 = scmp.le.s32.totalorder 2, %s19
      // Predicated region
      $region49: #{tpu_custom_call.1} parent=5 // pred_check
        %p552 = pneg %p551
      $region50: #{tpu_custom_call.1} parent=5 // pred_check_branch
        %554 = sbr.rel (%p552) target = $region52
      $region51: #{tpu_custom_call.1} parent=5 // pred_region
        %s555 = ssub.s32 %s19, 2
        // Predicated region
        $region53: #{tpu_custom_call.1} parent=51 // pred_check
          %p556 = pneg %p164
        $region54: #{tpu_custom_call.1} parent=51 // pred_check_branch
          %558 = sbr.rel (%p556) target = $region56
        $region55: #{tpu_custom_call.1} parent=51 // pred_region
          %s559 = sand.u32 %s149, 1
          %s560 = scalar_lea.sflag [#allocation5], %s559
          %s561 = sand.u32 %s149, 1
          %s562 = smul.addr %s561, 16
          %s563 = scalar_lea.vmem [#allocation8], %s562
          %564 = dma.done %s560, 256
        $region56: #{tpu_custom_call.1} parent=51 // pred_fallthru
          _
      $region52: #{tpu_custom_call.1} parent=5 // pred_fallthru
        _
    $region6: #{tpu_custom_call.1} parent=1 // loop_footer
      %s23 = sadd.s32 1, %s19
    $region7: #{tpu_custom_call.1} parent=1 // loop_footer_branch
      %18 = sbr.rel target = $region3
    $region8: #{tpu_custom_call.1} parent=1 // loop_exit
      _
    %565 = vsyncpa [#allocation4], 1
    %s566 = scalar_lea.sflag [#allocation4], 1
    %567 = vsyncpa %s566, 1
    %568 = vsyncpa [#allocation7], 1
    %s569 = scalar_lea.sflag [#allocation7], 1
    %570 = vsyncpa %s569, 1
    %571 = vsyncpa [#allocation5], 1
    %s572 = scalar_lea.sflag [#allocation5], 1
    %573 = vsyncpa %s572, 1

</llo_original>
